<compile_context>
chip_gen: v7x
topology: tpu7x:2x2x1
jax: 0.10.0
libtpu: 0.0.40
codegen_flags: <defaults>
</compile_context>

<pallas_src>
import functools

import jax
import jax.numpy as jnp
from jax.experimental import pallas as pl
from jax.experimental.pallas import tpu as pltpu

LANE = 128
SUBLANE = 8


def _round_up(n, m):
    return ((n + m - 1) // m) * m


def coattention_kernel(nv_true, ns_true, vis_ref, sem_ref, hid_ref,
                       Wva_ref, Wsa_ref, Whv_ref, Whs_ref, aux_ref,
                       Wcv_ref, Wcs_ref, bctx_ref, out_ref):
    # One block of TILE_B samples per grid step.
    # bf16 MXU operands, f32 accumulation; elementwise/softmax math in f32.
    hid_bf = hid_ref[...].astype(jnp.bfloat16)                        # (TB, H_pad)

    def attend(feat_ref, W_enc_ref, W_hid_ref, bias_row, w_row, n_true):
        feat3 = feat_ref[...]                                         # (TB, N_pad, D) f32
        tb, n_pad, d = feat3.shape
        # Leading-dim merge (N_pad % 8 == 0 -> layout-free) -> one dense matmul.
        feat2 = feat3.reshape(tb * n_pad, d)
        att1 = jnp.dot(feat2.astype(jnp.bfloat16), W_enc_ref[...],
                       preferred_element_type=jnp.float32)            # (TB*N_pad, A_pad)
        # Batched hidden projection; encoder + hidden biases pre-folded into
        # bias_row in the wrapper.
        att_h = jnp.dot(hid_bf, W_hid_ref[...],
                        preferred_element_type=jnp.float32) + bias_row  # (TB, A_pad)
        e = jnp.tanh(att1.reshape(tb, n_pad, -1) + att_h[:, None, :])   # (TB, N_pad, A_pad)
        # Width-1 projection as VPU multiply + lane reduction; its bias is
        # dropped (softmax is shift-invariant -> identical alphas).
        scores = jnp.sum(e * w_row, axis=-1, keepdims=True)             # (TB, N_pad, 1)
        if n_true != n_pad:
            # Mask padded sequence rows out of the softmax.
            row_ids = jax.lax.broadcasted_iota(jnp.int32, (1, n_pad, 1), 1)
            scores = jnp.where(row_ids < n_true, scores, -1e30)
        # Per-sample softmax over the sequence axis (dim=1 in PyTorch).
        m = jnp.max(scores, axis=1, keepdims=True)                      # (TB, 1, 1)
        p = jnp.exp(scores - m)
        denom = jnp.sum(p, axis=1, keepdims=True)
        alpha = p * pl.reciprocal(denom, approx=True)                   # (TB, N_pad, 1)
        # Weighted sum over the sequence axis (alpha broadcast over lanes,
        # padded rows are zero and have alpha == 0).
        return jnp.sum(feat3 * alpha, axis=1)                           # (TB, D)

    b_v_row = aux_ref[0:1, :]      # encoder_visual bias + hidden_visual bias
    b_s_row = aux_ref[1:2, :]      # encoder_semantic bias + hidden_semantic bias
    w_fv_row = aux_ref[2:3, :]     # full_attention_visual weight (row vector)
    w_fs_row = aux_ref[3:4, :]     # full_attention_semantic weight

    v_att = attend(vis_ref, Wva_ref, Whv_ref, b_v_row, w_fv_row, nv_true)
    a_att = attend(sem_ref, Wsa_ref, Whs_ref, b_s_row, w_fs_row, ns_true)

    # fullyconnected_ctx(concat(v_att, a_att)) == v_att @ Wc[:Dv] + a_att @ Wc[Dv:] + b
    ctx = (jnp.dot(v_att.astype(jnp.bfloat16), Wcv_ref[...],
                   preferred_element_type=jnp.float32)
           + jnp.dot(a_att.astype(jnp.bfloat16), Wcs_ref[...],
                     preferred_element_type=jnp.float32)
           + bctx_ref[...])                                             # (TB, C_pad)
    out_ref[...] = ctx


def _pad_last(x, target):
    pad = target - x.shape[-1]
    return x if pad == 0 else jnp.pad(x, [(0, 0)] * (x.ndim - 1) + [(0, pad)])


def _vmem_limit_bytes(tile_b, nv_p, dv, ns_p, ds, h_p, a_p, c_p):
    f32, bf16 = 4, 2
    io = 2 * f32 * (tile_b * nv_p * dv + tile_b * ns_p * ds
                    + tile_b * h_p + tile_b * c_p)                   # double-buffered I/O blocks
    wts = 2 * bf16 * ((dv + ds + 2 * h_p) * a_p + (dv + ds) * c_p)   # resident weights (default 2 bufs)
    aux = 2 * f32 * (SUBLANE * a_p + c_p)
    work = 4 * f32 * tile_b * max(nv_p, ns_p) * a_p                  # att1 / e / p intermediates
    total = int(1.5 * (io + wts + aux + work)) + (4 << 20)
    return min(max(total, 16 << 20), 64 << 20)


@functools.partial(jax.jit, static_argnames=("tile_b",))
def coattention_forward(vis, sem, hid, params, *, tile_b=32):
    # tile_b guidance: ~32 on v6e/v7x (flattened matmul M ~= 256 at Nv=8),
    # ~16 on v5e (M ~= 128 fills its 128-tall MXU).
    B, Nv, Dv = vis.shape
    _, Ns, Ds = sem.shape
    H = hid.shape[1]
    A = params["W_va"].shape[1]
    C = params["W_ctx_v"].shape[1]

    A_pad = _round_up(A, LANE)
    C_pad = _round_up(C, LANE)
    H_pad = _round_up(H, LANE)
    Nv_pad = _round_up(Nv, SUBLANE)
    Ns_pad = _round_up(Ns, SUBLANE)
    tile_b = min(_round_up(tile_b, SUBLANE), _round_up(B, SUBLANE))
    B_pad = _round_up(B, tile_b)

    # Zero padding: padded batch rows are sliced off, padded sequence rows are
    # masked in-kernel, padded feature/hidden/attention columns multiply zero
    # weights -> math unchanged.
    vis_p = jnp.pad(vis, ((0, B_pad - B), (0, Nv_pad - Nv), (0, 0)))
    sem_p = jnp.pad(sem, ((0, B_pad - B), (0, Ns_pad - Ns), (0, 0)))
    hid_p = jnp.pad(hid, ((0, B_pad - B), (0, H_pad - H)))

    bf16 = jnp.bfloat16
    W_va = _pad_last(params["W_va"], A_pad).astype(bf16)                     # (Dv, A_pad)
    W_sa = _pad_last(params["W_sa"], A_pad).astype(bf16)                     # (Ds, A_pad)
    W_hv = _pad_last(jnp.pad(params["W_hv"], ((0, H_pad - H), (0, 0))), A_pad).astype(bf16)
    W_hs = _pad_last(jnp.pad(params["W_hs"], ((0, H_pad - H), (0, 0))), A_pad).astype(bf16)
    W_cv = _pad_last(params["W_ctx_v"], C_pad).astype(bf16)                  # (Dv, C_pad)
    W_cs = _pad_last(params["W_ctx_s"], C_pad).astype(bf16)                  # (Ds, C_pad)
    b_ctx = _pad_last(params["b_ctx"], C_pad)                                # (1, C_pad) f32

    # Stack the small per-branch rows into one resident (8, A_pad) operand.
    # full_attention_* biases are dropped (shift-invariant under softmax).
    b_v_row = _pad_last(params["b_va"] + params["b_hv"], A_pad)
    b_s_row = _pad_last(params["b_sa"] + params["b_hs"], A_pad)
    w_fv_row = _pad_last(params["w_fv"].T, A_pad)
    w_fs_row = _pad_last(params["w_fs"].T, A_pad)
    aux = jnp.concatenate(
        [b_v_row, b_s_row, w_fv_row, w_fs_row,
         jnp.zeros((SUBLANE - 4, A_pad), jnp.float32)], axis=0)              # (8, A_pad)

    def per_block(shape):          # tiled over the batch grid axis
        nd = len(shape)
        return pl.BlockSpec(shape, lambda b: (b,) + (0,) * (nd - 1))

    def resident(shape):           # constant index map -> stays VMEM-resident
        nd = len(shape)
        return pl.BlockSpec(shape, lambda b: (0,) * nd)

    in_specs = [
        per_block((tile_b, Nv_pad, Dv)),       # visual features block
        per_block((tile_b, Ns_pad, Ds)),       # semantic features block
        per_block((tile_b, H_pad)),            # hidden state block
        resident(W_va.shape), resident(W_sa.shape),
        resident(W_hv.shape), resident(W_hs.shape),
        resident(aux.shape),
        resident(W_cv.shape), resident(W_cs.shape), resident(b_ctx.shape),
    ]
    out_specs = per_block((tile_b, C_pad))

    kernel = functools.partial(coattention_kernel, Nv, Ns)
    out = pl.pallas_call(
        kernel,
        grid=(B_pad // tile_b,),
        in_specs=in_specs,
        out_specs=out_specs,
        out_shape=jax.ShapeDtypeStruct((B_pad, C_pad), jnp.float32),
        compiler_params=pltpu.CompilerParams(
            dimension_semantics=("parallel",),   # shard batch grid over both TCs on v7x
            vmem_limit_bytes=_vmem_limit_bytes(
                tile_b, Nv_pad, Dv, Ns_pad, Ds, H_pad, A_pad, C_pad)),
    )(vis_p, sem_p, hid_p, W_va, W_sa, W_hv, W_hs, aux, W_cv, W_cs, b_ctx)

    return out[:B, :C]


def init_params(key, Dv, Ds, ctx_dim, H, A):
    keys = jax.random.split(key, 16)

    def lin(kw, kb, din, dout):
        scale = 1.0 / jnp.sqrt(din)
        W = jax.random.uniform(kw, (din, dout), jnp.float32, -scale, scale)
        b = jax.random.uniform(kb, (1, dout), jnp.float32, -scale, scale)
        return W, b

    W_va, b_va = lin(keys[0], keys[1], Dv, A)
    W_sa, b_sa = lin(keys[2], keys[3], Ds, A)
    W_hv, b_hv = lin(keys[4], keys[5], H, A)
    W_hs, b_hs = lin(keys[6], keys[7], H, A)
    w_fv, b_fv = lin(keys[8], keys[9], A, 1)
    w_fs, b_fs = lin(keys[10], keys[11], A, 1)
    W_ctx, b_ctx = lin(keys[12], keys[13], Dv + Ds, ctx_dim)   # concat order: (visual, semantic)
    return dict(W_va=W_va, b_va=b_va, W_sa=W_sa, b_sa=b_sa,
                W_hv=W_hv, b_hv=b_hv, W_hs=W_hs, b_hs=b_hs,
                w_fv=w_fv, b_fv=b_fv, w_fs=w_fs, b_fs=b_fs,
                W_ctx_v=W_ctx[:Dv], W_ctx_s=W_ctx[Dv:], b_ctx=b_ctx)


def reference_forward(vis, sem, hid, p):
    # Pure-JAX f32 reference, faithful to the PyTorch module (including the
    # full_attention_* biases, which cancel inside the softmax).
    def attend(feat, W_enc, b_enc, W_hid, b_hid, w_full, b_full):
        att1 = jnp.einsum("bnd,da->bna", feat, W_enc) + b_enc
        att_h = hid @ W_hid + b_hid
        e = jnp.tanh(att1 + att_h[:, None, :])
        scores = jnp.einsum("bna,ao->bn", e, w_full) + b_full[0, 0]
        alpha = jax.nn.softmax(scores, axis=1)
        return jnp.sum(feat * alpha[:, :, None], axis=1)

    v_att = attend(vis, p["W_va"], p["b_va"], p["W_hv"], p["b_hv"], p["w_fv"], p["b_fv"])
    a_att = attend(sem, p["W_sa"], p["b_sa"], p["W_hs"], p["b_hs"], p["w_fs"], p["b_fs"])
    return v_att @ p["W_ctx_v"] + a_att @ p["W_ctx_s"] + p["b_ctx"]


if __name__ == "__main__":
    Nv, Ns = 8, 6
    Dv, Ds = 32, 24             # encoder_visual / encoder_semantic context dims
    H, A, ctx_dim = 16, 32, 48  # hidden_dim, attention_dim, ctx_dim

    key = jax.random.PRNGKey(0)
    k_par, k1, k2 = jax.random.split(key, 3)
    params = init_params(k_par, Dv, Ds, ctx_dim, H, A)

    def make_inputs(k, batch):
        kv, ks, kh = jax.random.split(k, 3)
        return (jax.random.normal(kv, (batch, Nv, Dv), jnp.float32),
                jax.random.normal(ks, (batch, Ns, Ds), jnp.float32),
                jax.random.normal(kh, (batch, H), jnp.float32))

    # Tolerance accounts for bf16 MXU operands + approximate (EUP) reciprocal.
    TOL = dict(atol=4e-2, rtol=4e-2)

    # Small config (single grid step).
    vis, sem, hid = make_inputs(k1, 2)
    ctx = coattention_forward(vis, sem, hid, params, tile_b=8)
    jax.block_until_ready(ctx)
    ref = reference_forward(vis, sem, hid, params)
    assert ctx.shape == (2, ctx_dim)
    assert jnp.allclose(ctx, ref, **TOL), "small-batch mismatch vs JAX reference"

    # Larger, non-divisible batch: exercises multi-step batched grid + padding.
    vis2, sem2, hid2 = make_inputs(k2, 37)
    ctx2 = coattention_forward(vis2, sem2, hid2, params, tile_b=16)
    jax.block_until_ready(ctx2)
    ref2 = reference_forward(vis2, sem2, hid2, params)
    assert ctx2.shape == (37, ctx_dim)
    assert jnp.allclose(ctx2, ref2, **TOL), "batched-grid mismatch vs JAX reference"

    print("KERNEL_OK")
</pallas_src>

<mosaic_0001>
module attributes {stable_mosaic.version = 11 : i64} {
  func.func @coattention_kernel(%arg0: i32, %arg1: memref<8x8x32xf32, #tpu.memory_space<vmem>>, %arg2: memref<8x8x24xf32, #tpu.memory_space<vmem>>, %arg3: memref<8x128xf32, #tpu.memory_space<vmem>>, %arg4: memref<32x128xbf16, #tpu.memory_space<vmem>>, %arg5: memref<24x128xbf16, #tpu.memory_space<vmem>>, %arg6: memref<128x128xbf16, #tpu.memory_space<vmem>>, %arg7: memref<128x128xbf16, #tpu.memory_space<vmem>>, %arg8: memref<8x128xf32, #tpu.memory_space<vmem>>, %arg9: memref<32x128xbf16, #tpu.memory_space<vmem>>, %arg10: memref<24x128xbf16, #tpu.memory_space<vmem>>, %arg11: memref<1x128xf32, #tpu.memory_space<vmem>>, %arg12: memref<8x128xf32, #tpu.memory_space<vmem>>) attributes {dimension_semantics = [#tpu.dimension_semantics<parallel>], iteration_bounds = array<i64: 1>, scalar_prefetch = 0 : i64, scratch_operands = 0 : i64, tpu.core_type = #tpu.core_type<tc>, window_params = [{transform_indices = @transform_0, window_bounds = array<i64: 8, 8, 32>}, {transform_indices = @transform_1, window_bounds = array<i64: 8, 8, 24>}, {transform_indices = @transform_2, window_bounds = array<i64: 8, 128>}, {pipeline_mode = #tpu.pipeline_mode<synchronous>, transform_indices = @transform_3, window_bounds = array<i64: 32, 128>}, {pipeline_mode = #tpu.pipeline_mode<synchronous>, transform_indices = @transform_4, window_bounds = array<i64: 24, 128>}, {pipeline_mode = #tpu.pipeline_mode<synchronous>, transform_indices = @transform_5, window_bounds = array<i64: 128, 128>}, {pipeline_mode = #tpu.pipeline_mode<synchronous>, transform_indices = @transform_6, window_bounds = array<i64: 128, 128>}, {pipeline_mode = #tpu.pipeline_mode<synchronous>, transform_indices = @transform_7, window_bounds = array<i64: 8, 128>}, {pipeline_mode = #tpu.pipeline_mode<synchronous>, transform_indices = @transform_8, window_bounds = array<i64: 32, 128>}, {pipeline_mode = #tpu.pipeline_mode<synchronous>, transform_indices = @transform_9, window_bounds = array<i64: 24, 128>}, {pipeline_mode = #tpu.pipeline_mode<synchronous>, transform_indices = @transform_10, window_bounds = array<i64: 1, 128>}, {transform_indices = @transform_11, window_bounds = array<i64: 8, 128>}]} {
    %c0 = arith.constant 0 : index
    %c0_0 = arith.constant 0 : index
    %0 = vector.load %arg3[%c0, %c0_0] : memref<8x128xf32, #tpu.memory_space<vmem>>, vector<8x128xf32>
    %1 = arith.truncf %0 : vector<8x128xf32> to vector<8x128xbf16>
    %c0_1 = arith.constant 0 : index
    %c0_2 = arith.constant 0 : index
    %2 = vector.load %arg8[%c0_1, %c0_2] : memref<8x128xf32, #tpu.memory_space<vmem>>, vector<1x128xf32>
    %c1 = arith.constant 1 : index
    %c0_3 = arith.constant 0 : index
    %3 = vector.load %arg8[%c1, %c0_3] : memref<8x128xf32, #tpu.memory_space<vmem>>, vector<1x128xf32>
    %c2 = arith.constant 2 : index
    %c0_4 = arith.constant 0 : index
    %4 = vector.load %arg8[%c2, %c0_4] : memref<8x128xf32, #tpu.memory_space<vmem>>, vector<1x128xf32>
    %c3 = arith.constant 3 : index
    %c0_5 = arith.constant 0 : index
    %5 = vector.load %arg8[%c3, %c0_5] : memref<8x128xf32, #tpu.memory_space<vmem>>, vector<1x128xf32>
    %c0_6 = arith.constant 0 : index
    %c0_7 = arith.constant 0 : index
    %c0_8 = arith.constant 0 : index
    %6 = vector.load %arg1[%c0_6, %c0_7, %c0_8] : memref<8x8x32xf32, #tpu.memory_space<vmem>>, vector<8x8x32xf32>
    %7 = vector.shape_cast %6 : vector<8x8x32xf32> to vector<64x32xf32>
    %8 = arith.truncf %7 : vector<64x32xf32> to vector<64x32xbf16>
    %c0_9 = arith.constant 0 : index
    %c0_10 = arith.constant 0 : index
    %9 = vector.load %arg4[%c0_9, %c0_10] : memref<32x128xbf16, #tpu.memory_space<vmem>>, vector<32x128xbf16>
    %cst = arith.constant dense<0.000000e+00> : vector<64x128xf32>
    %10 = tpu.matmul %8, %9, %cst {dimension_numbers = #tpu.dot_dimension_numbers<[1], [0], [0], [1], [0, 0, 1, 1], [], []>} : vector<64x32xbf16>, vector<32x128xbf16>, vector<64x128xf32> -> vector<64x128xf32>
    %c0_11 = arith.constant 0 : index
    %c0_12 = arith.constant 0 : index
    %11 = vector.load %arg6[%c0_11, %c0_12] : memref<128x128xbf16, #tpu.memory_space<vmem>>, vector<128x128xbf16>
    %cst_13 = arith.constant dense<0.000000e+00> : vector<8x128xf32>
    %12 = tpu.matmul %1, %11, %cst_13 {dimension_numbers = #tpu.dot_dimension_numbers<[1], [0], [0], [1], [0, 0, 1, 1], [], []>} : vector<8x128xbf16>, vector<128x128xbf16>, vector<8x128xf32> -> vector<8x128xf32>
    %13 = vector.broadcast %2 : vector<1x128xf32> to vector<8x128xf32>
    %14 = arith.addf %12, %13 : vector<8x128xf32>
    %15 = vector.shape_cast %10 : vector<64x128xf32> to vector<8x8x128xf32>
    %16 = vector.shape_cast %14 : vector<8x128xf32> to vector<8x1x128xf32>
    %17 = vector.broadcast %16 : vector<8x1x128xf32> to vector<8x8x128xf32>
    %18 = arith.addf %15, %17 : vector<8x8x128xf32>
    %19 = math.tanh %18 : vector<8x8x128xf32>
    %20 = vector.shape_cast %4 : vector<1x128xf32> to vector<1x1x128xf32>
    %21 = vector.broadcast %20 : vector<1x1x128xf32> to vector<8x8x128xf32>
    %22 = arith.mulf %19, %21 : vector<8x8x128xf32>
    %cst_14 = arith.constant dense<0.000000e+00> : vector<8x8xf32>
    %23 = vector.multi_reduction <add>, %22, %cst_14 [2] : vector<8x8x128xf32> to vector<8x8xf32>
    %24 = vector.shape_cast %23 : vector<8x8xf32> to vector<8x8x1xf32>
    %cst_15 = arith.constant dense<0xFF800000> : vector<8x1xf32>
    %25 = vector.multi_reduction <maximumf>, %24, %cst_15 [1] : vector<8x8x1xf32> to vector<8x1xf32>
    %26 = vector.shape_cast %25 : vector<8x1xf32> to vector<8x1x1xf32>
    %27 = vector.broadcast %26 : vector<8x1x1xf32> to vector<8x8x1xf32>
    %28 = arith.subf %24, %27 : vector<8x8x1xf32>
    %29 = math.exp %28 : vector<8x8x1xf32>
    %cst_16 = arith.constant dense<0.000000e+00> : vector<8x1xf32>
    %30 = vector.multi_reduction <add>, %29, %cst_16 [1] : vector<8x8x1xf32> to vector<8x1xf32>
    %31 = vector.shape_cast %30 : vector<8x1xf32> to vector<8x1x1xf32>
    %32 = tpu.reciprocal %31 {approx = true} : vector<8x1x1xf32> -> vector<8x1x1xf32>
    %33 = vector.broadcast %32 : vector<8x1x1xf32> to vector<8x8x1xf32>
    %34 = arith.mulf %29, %33 : vector<8x8x1xf32>
    %35 = vector.broadcast %34 : vector<8x8x1xf32> to vector<8x8x32xf32>
    %36 = arith.mulf %6, %35 : vector<8x8x32xf32>
    %cst_17 = arith.constant dense<0.000000e+00> : vector<8x32xf32>
    %37 = vector.multi_reduction <add>, %36, %cst_17 [1] : vector<8x8x32xf32> to vector<8x32xf32>
    %c0_18 = arith.constant 0 : index
    %c0_19 = arith.constant 0 : index
    %c0_20 = arith.constant 0 : index
    %38 = vector.load %arg2[%c0_18, %c0_19, %c0_20] : memref<8x8x24xf32, #tpu.memory_space<vmem>>, vector<8x8x24xf32>
    %39 = vector.shape_cast %38 : vector<8x8x24xf32> to vector<64x24xf32>
    %40 = arith.truncf %39 : vector<64x24xf32> to vector<64x24xbf16>
    %c0_21 = arith.constant 0 : index
    %c0_22 = arith.constant 0 : index
    %41 = vector.load %arg5[%c0_21, %c0_22] : memref<24x128xbf16, #tpu.memory_space<vmem>>, vector<24x128xbf16>
    %cst_23 = arith.constant dense<0.000000e+00> : vector<64x128xf32>
    %42 = tpu.matmul %40, %41, %cst_23 {dimension_numbers = #tpu.dot_dimension_numbers<[1], [0], [0], [1], [0, 0, 1, 1], [], []>} : vector<64x24xbf16>, vector<24x128xbf16>, vector<64x128xf32> -> vector<64x128xf32>
    %c0_24 = arith.constant 0 : index
    %c0_25 = arith.constant 0 : index
    %43 = vector.load %arg7[%c0_24, %c0_25] : memref<128x128xbf16, #tpu.memory_space<vmem>>, vector<128x128xbf16>
    %cst_26 = arith.constant dense<0.000000e+00> : vector<8x128xf32>
    %44 = tpu.matmul %1, %43, %cst_26 {dimension_numbers = #tpu.dot_dimension_numbers<[1], [0], [0], [1], [0, 0, 1, 1], [], []>} : vector<8x128xbf16>, vector<128x128xbf16>, vector<8x128xf32> -> vector<8x128xf32>
    %45 = vector.broadcast %3 : vector<1x128xf32> to vector<8x128xf32>
    %46 = arith.addf %44, %45 : vector<8x128xf32>
    %47 = vector.shape_cast %42 : vector<64x128xf32> to vector<8x8x128xf32>
    %48 = vector.shape_cast %46 : vector<8x128xf32> to vector<8x1x128xf32>
    %49 = vector.broadcast %48 : vector<8x1x128xf32> to vector<8x8x128xf32>
    %50 = arith.addf %47, %49 : vector<8x8x128xf32>
    %51 = math.tanh %50 : vector<8x8x128xf32>
    %52 = vector.shape_cast %5 : vector<1x128xf32> to vector<1x1x128xf32>
    %53 = vector.broadcast %52 : vector<1x1x128xf32> to vector<8x8x128xf32>
    %54 = arith.mulf %51, %53 : vector<8x8x128xf32>
    %cst_27 = arith.constant dense<0.000000e+00> : vector<8x8xf32>
    %55 = vector.multi_reduction <add>, %54, %cst_27 [2] : vector<8x8x128xf32> to vector<8x8xf32>
    %56 = vector.shape_cast %55 : vector<8x8xf32> to vector<8x8x1xf32>
    %57 = tpu.iota {dimensions = array<i32: 1>} : vector<1x8x1xi32>
    %c6_i32 = arith.constant 6 : i32
    %58 = vector.broadcast %c6_i32 : i32 to vector<1x8x1xi32>
    %59 = arith.cmpi slt, %57, %58 : vector<1x8x1xi32>
    %cst_28 = arith.constant -1.000000e+30 : f32
    %60 = vector.shape_cast %59 : vector<1x8x1xi1> to vector<1x8x1xi1>
    %61 = vector.broadcast %60 : vector<1x8x1xi1> to vector<8x8x1xi1>
    %62 = vector.broadcast %cst_28 : f32 to vector<8x8x1xf32>
    %63 = arith.select %61, %56, %62 : vector<8x8x1xi1>, vector<8x8x1xf32>
    %cst_29 = arith.constant dense<0xFF800000> : vector<8x1xf32>
    %64 = vector.multi_reduction <maximumf>, %63, %cst_29 [1] : vector<8x8x1xf32> to vector<8x1xf32>
    %65 = vector.shape_cast %64 : vector<8x1xf32> to vector<8x1x1xf32>
    %66 = vector.broadcast %65 : vector<8x1x1xf32> to vector<8x8x1xf32>
    %67 = arith.subf %63, %66 : vector<8x8x1xf32>
    %68 = math.exp %67 : vector<8x8x1xf32>
    %cst_30 = arith.constant dense<0.000000e+00> : vector<8x1xf32>
    %69 = vector.multi_reduction <add>, %68, %cst_30 [1] : vector<8x8x1xf32> to vector<8x1xf32>
    %70 = vector.shape_cast %69 : vector<8x1xf32> to vector<8x1x1xf32>
    %71 = tpu.reciprocal %70 {approx = true} : vector<8x1x1xf32> -> vector<8x1x1xf32>
    %72 = vector.broadcast %71 : vector<8x1x1xf32> to vector<8x8x1xf32>
    %73 = arith.mulf %68, %72 : vector<8x8x1xf32>
    %74 = vector.broadcast %73 : vector<8x8x1xf32> to vector<8x8x24xf32>
    %75 = arith.mulf %38, %74 : vector<8x8x24xf32>
    %cst_31 = arith.constant dense<0.000000e+00> : vector<8x24xf32>
    %76 = vector.multi_reduction <add>, %75, %cst_31 [1] : vector<8x8x24xf32> to vector<8x24xf32>
    %77 = arith.truncf %37 : vector<8x32xf32> to vector<8x32xbf16>
    %c0_32 = arith.constant 0 : index
    %c0_33 = arith.constant 0 : index
    %78 = vector.load %arg9[%c0_32, %c0_33] : memref<32x128xbf16, #tpu.memory_space<vmem>>, vector<32x128xbf16>
    %cst_34 = arith.constant dense<0.000000e+00> : vector<8x128xf32>
    %79 = tpu.matmul %77, %78, %cst_34 {dimension_numbers = #tpu.dot_dimension_numbers<[1], [0], [0], [1], [0, 0, 1, 1], [], []>} : vector<8x32xbf16>, vector<32x128xbf16>, vector<8x128xf32> -> vector<8x128xf32>
    %80 = arith.truncf %76 : vector<8x24xf32> to vector<8x24xbf16>
    %c0_35 = arith.constant 0 : index
    %c0_36 = arith.constant 0 : index
    %81 = vector.load %arg10[%c0_35, %c0_36] : memref<24x128xbf16, #tpu.memory_space<vmem>>, vector<24x128xbf16>
    %cst_37 = arith.constant dense<0.000000e+00> : vector<8x128xf32>
    %82 = tpu.matmul %80, %81, %cst_37 {dimension_numbers = #tpu.dot_dimension_numbers<[1], [0], [0], [1], [0, 0, 1, 1], [], []>} : vector<8x24xbf16>, vector<24x128xbf16>, vector<8x128xf32> -> vector<8x128xf32>
    %83 = arith.addf %79, %82 : vector<8x128xf32>
    %c0_38 = arith.constant 0 : index
    %c0_39 = arith.constant 0 : index
    %84 = vector.load %arg11[%c0_38, %c0_39] : memref<1x128xf32, #tpu.memory_space<vmem>>, vector<1x128xf32>
    %85 = vector.broadcast %84 : vector<1x128xf32> to vector<8x128xf32>
    %86 = arith.addf %83, %85 : vector<8x128xf32>
    %c0_40 = arith.constant 0 : index
    %c0_41 = arith.constant 0 : index
    %87 = vector.load %arg12[%c0_40, %c0_41] : memref<8x128xf32, #tpu.memory_space<vmem>>, vector<8x128xf32>
    tpu.vector_store %arg12[%c0_40, %c0_41], %86 {strides = array<i32>} : memref<8x128xf32, #tpu.memory_space<vmem>>, vector<8x128xf32>,
    return
  }
  func.func @transform_0(%arg0: i32) -> (i32, i32, i32) {
    %c0_i32 = arith.constant 0 : i32
    %c0_i32_0 = arith.constant 0 : i32
    %c0_i32_1 = arith.constant 0 : i32
    return %arg0, %c0_i32, %c0_i32_0 : i32, i32, i32
  }
  func.func @transform_1(%arg0: i32) -> (i32, i32, i32) {
    %c0_i32 = arith.constant 0 : i32
    %c0_i32_0 = arith.constant 0 : i32
    %c0_i32_1 = arith.constant 0 : i32
    return %arg0, %c0_i32, %c0_i32_0 : i32, i32, i32
  }
  func.func @transform_2(%arg0: i32) -> (i32, i32) {
    %c0_i32 = arith.constant 0 : i32
    %c0_i32_0 = arith.constant 0 : i32
    return %arg0, %c0_i32 : i32, i32
  }
  func.func @transform_3(%arg0: i32) -> (i32, i32) {
    %c0_i32 = arith.constant 0 : i32
    %c0_i32_0 = arith.constant 0 : i32
    %c0_i32_1 = arith.constant 0 : i32
    return %c0_i32, %c0_i32_0 : i32, i32
  }
  func.func @transform_4(%arg0: i32) -> (i32, i32) {
    %c0_i32 = arith.constant 0 : i32
    %c0_i32_0 = arith.constant 0 : i32
    %c0_i32_1 = arith.constant 0 : i32
    return %c0_i32, %c0_i32_0 : i32, i32
  }
  func.func @transform_5(%arg0: i32) -> (i32, i32) {
    %c0_i32 = arith.constant 0 : i32
    %c0_i32_0 = arith.constant 0 : i32
    %c0_i32_1 = arith.constant 0 : i32
    return %c0_i32, %c0_i32_0 : i32, i32
  }
  func.func @transform_6(%arg0: i32) -> (i32, i32) {
    %c0_i32 = arith.constant 0 : i32
    %c0_i32_0 = arith.constant 0 : i32
    %c0_i32_1 = arith.constant 0 : i32
    return %c0_i32, %c0_i32_0 : i32, i32
  }
  func.func @transform_7(%arg0: i32) -> (i32, i32) {
    %c0_i32 = arith.constant 0 : i32
    %c0_i32_0 = arith.constant 0 : i32
    %c0_i32_1 = arith.constant 0 : i32
    return %c0_i32, %c0_i32_0 : i32, i32
  }
  func.func @transform_8(%arg0: i32) -> (i32, i32) {
    %c0_i32 = arith.constant 0 : i32
    %c0_i32_0 = arith.constant 0 : i32
    %c0_i32_1 = arith.constant 0 : i32
    return %c0_i32, %c0_i32_0 : i32, i32
  }
  func.func @transform_9(%arg0: i32) -> (i32, i32) {
    %c0_i32 = arith.constant 0 : i32
    %c0_i32_0 = arith.constant 0 : i32
    %c0_i32_1 = arith.constant 0 : i32
    return %c0_i32, %c0_i32_0 : i32, i32
  }
  func.func @transform_10(%arg0: i32) -> (i32, i32) {
    %c0_i32 = arith.constant 0 : i32
    %c0_i32_0 = arith.constant 0 : i32
    %c0_i32_1 = arith.constant 0 : i32
    return %c0_i32, %c0_i32_0 : i32, i32
  }
  func.func @transform_11(%arg0: i32) -> (i32, i32) {
    %c0_i32 = arith.constant 0 : i32
    %c0_i32_0 = arith.constant 0 : i32
    return %arg0, %c0_i32 : i32, i32
  }
}

</mosaic_0001>

<llo_original>
// kernel: coattention_forward.1
$region0: #{coattention_forward.1}
  #allocation0 [shape = 'u32[]', space=smem, size = 0x4, offset = 0x4, fixed_abs, tag = 'smem constant byte address 0x4 - core index']
  #allocation1 [shape = 'u32[144,128]{1,0:T(1,128)}', space=vmem, size = 0x12000, scoped, tag = 'internal scratch']
  %s0 = inlined_call_operand.vmem [shape: f32[8,8,32], index: 0, kind: input, shape index: {}]
  %s1 = inlined_call_operand.vmem [shape: f32[8,8,24], index: 1, kind: input, shape index: {}]
  %s2 = inlined_call_operand.vmem [shape: f32[8,128], index: 2, kind: input, shape index: {}]
  %s3 = inlined_call_operand.vmem [shape: bf16[32,128], index: 3, kind: input, shape index: {}]
  %s4 = inlined_call_operand.vmem [shape: bf16[24,128], index: 4, kind: input, shape index: {}]
  %s5 = inlined_call_operand.vmem [shape: bf16[128,128], index: 5, kind: input, shape index: {}]
  %s6 = inlined_call_operand.vmem [shape: bf16[128,128], index: 6, kind: input, shape index: {}]
  %s7 = inlined_call_operand.vmem [shape: f32[8,128], index: 7, kind: input, shape index: {}]
  %s8 = inlined_call_operand.vmem [shape: bf16[32,128], index: 8, kind: input, shape index: {}]
  %s9 = inlined_call_operand.vmem [shape: bf16[24,128], index: 9, kind: input, shape index: {}]
  %s10 = inlined_call_operand.vmem [shape: f32[1,128], index: 10, kind: input, shape index: {}]
  %s11 = inlined_call_operand.vmem [shape: f32[8,128], index: 11, kind: output, shape index: {}]
  %s12 = sld [smem:[#allocation0]]
  $region54: #{coattention_forward.1} parent=0
    _
  %s14 = ssub.s32 1, %s12
  %s15 = scalar_select 0, %s14, %s12
  // Predicated region
  $region2: #{coattention_forward.1} parent=0 // pred_check
    _
  $region3: #{coattention_forward.1} parent=0 // pred_check_branch
    %17 = sbr.rel (0) target = $region5
  $region4: #{coattention_forward.1} parent=0 // pred_region
    _
  $region5: #{coattention_forward.1} parent=0 // pred_fallthru
    _
  // Predicated region
  $region6: #{coattention_forward.1} parent=0 // pred_check
    _
  $region7: #{coattention_forward.1} parent=0 // pred_check_branch
    %19 = sbr.rel (0) target = $region9
  $region8: #{coattention_forward.1} parent=0 // pred_region
    _
  $region9: #{coattention_forward.1} parent=0 // pred_fallthru
    _
  // Predicated region
  $region10: #{coattention_forward.1} parent=0 // pred_check
    _
  $region11: #{coattention_forward.1} parent=0 // pred_check_branch
    %21 = sbr.rel (0) target = $region13
  $region12: #{coattention_forward.1} parent=0 // pred_region
    _
  $region13: #{coattention_forward.1} parent=0 // pred_fallthru
    _
  // Predicated region
  $region14: #{coattention_forward.1} parent=0 // pred_check
    _
  $region15: #{coattention_forward.1} parent=0 // pred_check_branch
    %23 = sbr.rel (0) target = $region17
  $region16: #{coattention_forward.1} parent=0 // pred_region
    _
  $region17: #{coattention_forward.1} parent=0 // pred_fallthru
    _
  // Predicated region
  $region18: #{coattention_forward.1} parent=0 // pred_check
    _
  $region19: #{coattention_forward.1} parent=0 // pred_check_branch
    %25 = sbr.rel (0) target = $region21
  $region20: #{coattention_forward.1} parent=0 // pred_region
    _
  $region21: #{coattention_forward.1} parent=0 // pred_fallthru
    _
  // Predicated region
  $region22: #{coattention_forward.1} parent=0 // pred_check
    _
  $region23: #{coattention_forward.1} parent=0 // pred_check_branch
    %27 = sbr.rel (0) target = $region25
  $region24: #{coattention_forward.1} parent=0 // pred_region
    _
  $region25: #{coattention_forward.1} parent=0 // pred_fallthru
    _
  // Predicated region
  $region26: #{coattention_forward.1} parent=0 // pred_check
    _
  $region27: #{coattention_forward.1} parent=0 // pred_check_branch
    %29 = sbr.rel (0) target = $region29
  $region28: #{coattention_forward.1} parent=0 // pred_region
    _
  $region29: #{coattention_forward.1} parent=0 // pred_fallthru
    _
  // Predicated region
  $region30: #{coattention_forward.1} parent=0 // pred_check
    _
  $region31: #{coattention_forward.1} parent=0 // pred_check_branch
    %31 = sbr.rel (0) target = $region33
  $region32: #{coattention_forward.1} parent=0 // pred_region
    _
  $region33: #{coattention_forward.1} parent=0 // pred_fallthru
    _
  // Predicated region
  $region34: #{coattention_forward.1} parent=0 // pred_check
    _
  $region35: #{coattention_forward.1} parent=0 // pred_check_branch
    %33 = sbr.rel (0) target = $region37
  $region36: #{coattention_forward.1} parent=0 // pred_region
    _
  $region37: #{coattention_forward.1} parent=0 // pred_fallthru
    _
  // Predicated region
  $region38: #{coattention_forward.1} parent=0 // pred_check
    _
  $region39: #{coattention_forward.1} parent=0 // pred_check_branch
    %35 = sbr.rel (0) target = $region41
  $region40: #{coattention_forward.1} parent=0 // pred_region
    _
  $region41: #{coattention_forward.1} parent=0 // pred_fallthru
    _
  // Predicated region
  $region42: #{coattention_forward.1} parent=0 // pred_check
    _
  $region43: #{coattention_forward.1} parent=0 // pred_check_branch
    %37 = sbr.rel (0) target = $region45
  $region44: #{coattention_forward.1} parent=0 // pred_region
    _
  $region45: #{coattention_forward.1} parent=0 // pred_fallthru
    _
  %v39 = vld [vmem:[%s2] sm:$0xff]
  %v40 = vpack.c.bf16 %v39, %v39
  %v41 = vld [vmem:[%s7] sm:$0x1]
  %v42 = vld [vmem:[%s7 + $0x1] sm:$0x1]
  %v43 = vld [vmem:[%s7 + $0x2] sm:$0x1]
  %v44 = vld [vmem:[%s7 + $0x3] sm:$0x1]
  %v45 = vld [vmem:[%s0] sm:$0xff]
  %v46 = vld [vmem:[%s0 + $0x8] sm:$0xff]
  %v47 = vld [vmem:[%s0 + $0x10] sm:$0xff]
  %v48 = vld [vmem:[%s0 + $0x18] sm:$0xff]
  %v49 = vld [vmem:[%s0 + $0x20] sm:$0xff]
  %v50 = vld [vmem:[%s0 + $0x28] sm:$0xff]
  %v51 = vld [vmem:[%s0 + $0x30] sm:$0xff]
  %v52 = vld [vmem:[%s0 + $0x38] sm:$0xff]
  %v53 = vpack.c.bf16 %v46, %v45
  %v54 = vpack.c.bf16 %v48, %v47
  %v55 = vpack.c.bf16 %v50, %v49
  %v56 = vpack.c.bf16 %v52, %v51
  %v57 = vld [vmem:[%s3] sm:$0xf]
  %v58 = vld [vmem:[%s3 + $0x4] sm:$0xf]
  %v59 = vld [vmem:[%s3 + $0x8] sm:$0xf]
  %v60 = vld [vmem:[%s3 + $0xc] sm:$0xf]
  %v65 = vunpack.c.l.b16 %v57
  %v66 = vunpack.c.l.b16 %v58
  %v67 = vunpack.c.l.b16 %v59
  %v68 = vunpack.c.l.b16 %v60
  %v69 = vpack.c.b16 %v66, %v65
  %v70 = vpack.c.b16 %v68, %v67
  %vm73 = vcmask 261120
  %v75 = vsel %vm73, %v53, 0
  %v78 = vsel %vm73, %v54, 0
  %v81 = vsel %vm73, %v55, 0
  %v84 = vsel %vm73, %v56, 0
  %86 = vmatprep.subr.bf16.mxu0 0
  %87 = vmatpush1.bf16.msra.mxu0 %v69
  %88 = vmatprep.subr.bf16.mxu0 0
  %89 = vmatpush1.bf16.msra.mxu0 %v70
  %90 = vmatprep.subr.bf16.mxu0 0
  %91 = vmatpush1.bf16.msra.mxu0 0
  %92 = vmatprep.subr.bf16.mxu0 0
  %93 = vmatpush1.bf16.msra.mxu0 0
  %94 = vmatprep.subr.bf16.mxu0 0
  %95 = vmatpush1.bf16.msra.mxu0 0
  %96 = vmatprep.subr.bf16.mxu0 0
  %97 = vmatpush1.bf16.msra.mxu0 0
  %98 = vmatprep.subr.bf16.mxu0 0
  %99 = vmatpush1.bf16.msra.mxu0 0
  %100 = vmatprep.subr.bf16.mxu0 0
  %101 = vmatpush1.bf16.msra.mxu0 0
  %102 = vmatprep.subr.bf16.mxu0 0
  %103 = vmatpush1.bf16.msra.mxu0 0
  %104 = vmatprep.subr.bf16.mxu0 0
  %105 = vmatpush1.bf16.msra.mxu0 0
  %106 = vmatprep.subr.bf16.mxu0 0
  %107 = vmatpush1.bf16.msra.mxu0 0
  %108 = vmatprep.subr.bf16.mxu0 0
  %109 = vmatpush1.bf16.msra.mxu0 0
  %110 = vmatprep.subr.bf16.mxu0 0
  %111 = vmatpush1.bf16.msra.mxu0 0
  %112 = vmatprep.subr.bf16.mxu0 0
  %113 = vmatpush1.bf16.msra.mxu0 0
  %114 = vmatprep.subr.bf16.mxu0 0
  %115 = vmatpush1.bf16.msra.mxu0 0
  %116 = vmatprep.subr.bf16.mxu0 0
  %117 = vmatpush1.bf16.msra.mxu0 0
  %118 = vmatprep.mubr.bf16.mxu0 0
  %119 = vmatmul.mubr.bf16.gmra.mrb[0].mxu0 %v75
  %v120 = vpop.f32.mrb[0].mxu0
  %v121 = vadd.f32 0.0, %v120
  %v122 = vpop.f32.mrb[0].mxu0
  %v123 = vpop.f32.mrb[0].mxu0
  %v124 = vadd.f32 0.0, %v123
  %v125 = vpop.f32.mrb[0].mxu0
  %126 = vmatprep.mubr.bf16.mxu0 0
  %127 = vmatmul.mubr.bf16.gmra.mrb[0].mxu0 %v78
  %v128 = vpop.f32.mrb[0].mxu0
  %v129 = vadd.f32 0.0, %v128
  %v130 = vpop.f32.mrb[0].mxu0
  %v131 = vpop.f32.mrb[0].mxu0
  %v132 = vadd.f32 0.0, %v131
  %v133 = vpop.f32.mrb[0].mxu0
  %134 = vmatprep.mubr.bf16.mxu0 0
  %135 = vmatmul.mubr.bf16.gmra.mrb[0].mxu0 %v81
  %v136 = vpop.f32.mrb[0].mxu0
  %v137 = vadd.f32 0.0, %v136
  %v138 = vpop.f32.mrb[0].mxu0
  %v139 = vpop.f32.mrb[0].mxu0
  %v140 = vadd.f32 0.0, %v139
  %v141 = vpop.f32.mrb[0].mxu0
  %142 = vmatprep.mubr.bf16.mxu0 0
  %143 = vmatmul.mubr.bf16.gmra.mrb[0].mxu0 %v84
  %v144 = vpop.f32.mrb[0].mxu0
  %v145 = vadd.f32 0.0, %v144
  %v146 = vpop.f32.mrb[0].mxu0
  %v147 = vpop.f32.mrb[0].mxu0
  %v148 = vadd.f32 0.0, %v147
  %v149 = vpop.f32.mrb[0].mxu0
  %150 = vdwg.mxu0
  %v151 = vld [vmem:[%s5] sm:$0xf]
  %v152 = vld [vmem:[%s5 + $0x4] sm:$0xf]
  %v153 = vld [vmem:[%s5 + $0x8] sm:$0xf]
  %v154 = vld [vmem:[%s5 + $0xc] sm:$0xf]
  %v155 = vld [vmem:[%s5 + $0x10] sm:$0xf]
  %v156 = vld [vmem:[%s5 + $0x14] sm:$0xf]
  %v157 = vld [vmem:[%s5 + $0x18] sm:$0xf]
  %v158 = vld [vmem:[%s5 + $0x1c] sm:$0xf]
  %v159 = vld [vmem:[%s5 + $0x20] sm:$0xf]
  %v160 = vld [vmem:[%s5 + $0x24] sm:$0xf]
  %v161 = vld [vmem:[%s5 + $0x28] sm:$0xf]
  %v162 = vld [vmem:[%s5 + $0x2c] sm:$0xf]
  %v163 = vld [vmem:[%s5 + $0x30] sm:$0xf]
  %v164 = vld [vmem:[%s5 + $0x34] sm:$0xf]
  %v165 = vld [vmem:[%s5 + $0x38] sm:$0xf]
  %v166 = vld [vmem:[%s5 + $0x3c] sm:$0xf]
  %v167 = vlaneseq
  %v168 = vshrl.u32 %v167, 7
  %v169 = vsub.s32 0, %v168
  %v170 = vrot.slane %v41, %v169
  %v187 = vunpack.c.l.b16 %v151
  %v188 = vunpack.c.l.b16 %v152
  %v189 = vunpack.c.l.b16 %v153
  %v190 = vunpack.c.l.b16 %v154
  %v191 = vunpack.c.l.b16 %v155
  %v192 = vunpack.c.l.b16 %v156
  %v193 = vunpack.c.l.b16 %v157
  %v194 = vunpack.c.l.b16 %v158
  %v195 = vunpack.c.l.b16 %v159
  %v196 = vunpack.c.l.b16 %v160
  %v197 = vunpack.c.l.b16 %v161
  %v198 = vunpack.c.l.b16 %v162
  %v199 = vunpack.c.l.b16 %v163
  %v200 = vunpack.c.l.b16 %v164
  %v201 = vunpack.c.l.b16 %v165
  %v202 = vunpack.c.l.b16 %v166
  %v203 = vpack.c.b16 %v188, %v187
  %v204 = vpack.c.b16 %v190, %v189
  %v205 = vpack.c.b16 %v192, %v191
  %v206 = vpack.c.b16 %v194, %v193
  %v207 = vpack.c.b16 %v196, %v195
  %v208 = vpack.c.b16 %v198, %v197
  %v209 = vpack.c.b16 %v200, %v199
  %v210 = vpack.c.b16 %v202, %v201
  %219 = vmatprep.subr.bf16.mxu0 0
  %220 = vmatpush1.bf16.msra.mxu0 %v203
  %221 = vmatprep.subr.bf16.mxu0 0
  %222 = vmatpush1.bf16.msra.mxu0 %v204
  %223 = vmatprep.subr.bf16.mxu0 0
  %224 = vmatpush1.bf16.msra.mxu0 %v205
  %225 = vmatprep.subr.bf16.mxu0 0
  %226 = vmatpush1.bf16.msra.mxu0 %v206
  %227 = vmatprep.subr.bf16.mxu0 0
  %228 = vmatpush1.bf16.msra.mxu0 %v207
  %229 = vmatprep.subr.bf16.mxu0 0
  %230 = vmatpush1.bf16.msra.mxu0 %v208
  %231 = vmatprep.subr.bf16.mxu0 0
  %232 = vmatpush1.bf16.msra.mxu0 %v209
  %233 = vmatprep.subr.bf16.mxu0 0
  %234 = vmatpush1.bf16.msra.mxu0 %v210
  %235 = vmatprep.subr.bf16.mxu0 0
  %236 = vmatpush1.bf16.msra.mxu0 0
  %237 = vmatprep.subr.bf16.mxu0 0
  %238 = vmatpush1.bf16.msra.mxu0 0
  %239 = vmatprep.subr.bf16.mxu0 0
  %240 = vmatpush1.bf16.msra.mxu0 0
  %241 = vmatprep.subr.bf16.mxu0 0
  %242 = vmatpush1.bf16.msra.mxu0 0
  %243 = vmatprep.subr.bf16.mxu0 0
  %244 = vmatpush1.bf16.msra.mxu0 0
  %245 = vmatprep.subr.bf16.mxu0 0
  %246 = vmatpush1.bf16.msra.mxu0 0
  %247 = vmatprep.subr.bf16.mxu0 0
  %248 = vmatpush1.bf16.msra.mxu0 0
  %249 = vmatprep.subr.bf16.mxu0 0
  %250 = vmatpush1.bf16.msra.mxu0 0
  %251 = vmatprep.mubr.bf16.mxu0 0
  %252 = vmatmul.mubr.bf16.gmra.mrb[0].mxu0 %v40
  %v253 = vpop.f32.mrb[0].mxu0
  %v254 = vadd.f32 %v170, %v253
  %v255 = vpop.f32.mrb[0].mxu0
  %v256 = vpop.f32.mrb[0].mxu0
  %v257 = vpop.f32.mrb[0].mxu0
  %258 = vdwg.mxu0
  %v260 = vcombine.high %v254, %v254
  %v262 = vunpack.c.l.s4 1966171168
  %v263 = vunpack.c.0.s8 %v262
  %v264 = vlaneseq
  %v265 = vshrl.u32 %v264, 7
  %v266 = vsub.s32 %v263, %v265
  %v267 = vrot.slane %v254, %v266
  %v269 = vunpack.c.l.s4 1966171168
  %v270 = vunpack.c.0.s8 %v269
  %v271 = vlaneseq
  %v272 = vshrl.u32 %v271, 7
  %v273 = vsub.s32 %v270, %v272
  %v274 = vrot.slane %v260, %v273
  %v275 = vcombine.high %v267, %v267
  %v276 = vcombine.high %v274, %v274
  %v278 = vunpack.c.l.s4 1966171168
  %v279 = vunpack.c.0.s8 %v278
  %v280 = vlaneseq
  %v281 = vshrl.u32 %v280, 7
  %v282 = vsub.s32 %v279, %v281
  %v283 = vrot.slane %v267, %v282
  %v285 = vunpack.c.l.s4 1966171168
  %v286 = vunpack.c.0.s8 %v285
  %v287 = vlaneseq
  %v288 = vshrl.u32 %v287, 7
  %v289 = vsub.s32 %v286, %v288
  %v290 = vrot.slane %v274, %v289
  %v292 = vunpack.c.l.s4 1966171168
  %v293 = vunpack.c.0.s8 %v292
  %v294 = vlaneseq
  %v295 = vshrl.u32 %v294, 7
  %v296 = vsub.s32 %v293, %v295
  %v297 = vrot.slane %v275, %v296
  %v299 = vunpack.c.l.s4 1966171168
  %v300 = vunpack.c.0.s8 %v299
  %v301 = vlaneseq
  %v302 = vshrl.u32 %v301, 7
  %v303 = vsub.s32 %v300, %v302
  %v304 = vrot.slane %v276, %v303
  %v305 = vcombine.high %v283, %v283
  %v306 = vcombine.high %v290, %v290
  %v307 = vcombine.high %v297, %v297
  %v308 = vcombine.high %v304, %v304
  %v309 = vlaneseq
  %v310 = vshrl.u32 %v309, 7
  %v311 = vsub.s32 0, %v310
  %v312 = vrot.slane %v283, %v311
  %v313 = vlaneseq
  %v314 = vshrl.u32 %v313, 7
  %v315 = vsub.s32 0, %v314
  %v316 = vrot.slane %v297, %v315
  %v317 = vlaneseq
  %v318 = vshrl.u32 %v317, 7
  %v319 = vsub.s32 0, %v318
  %v320 = vrot.slane %v305, %v319
  %v321 = vlaneseq
  %v322 = vshrl.u32 %v321, 7
  %v323 = vsub.s32 0, %v322
  %v324 = vrot.slane %v307, %v323
  %v325 = vlaneseq
  %v326 = vshrl.u32 %v325, 7
  %v327 = vsub.s32 0, %v326
  %v328 = vrot.slane %v290, %v327
  %v329 = vlaneseq
  %v330 = vshrl.u32 %v329, 7
  %v331 = vsub.s32 0, %v330
  %v332 = vrot.slane %v304, %v331
  %v333 = vlaneseq
  %v334 = vshrl.u32 %v333, 7
  %v335 = vsub.s32 0, %v334
  %v336 = vrot.slane %v306, %v335
  %v337 = vlaneseq
  %v338 = vshrl.u32 %v337, 7
  %v339 = vsub.s32 0, %v338
  %v340 = vrot.slane %v308, %v339
  %v349 = vadd.f32 %v121, %v312
  %v350 = vadd.f32 %v124, %v316
  %v351 = vadd.f32 %v129, %v320
  %v352 = vadd.f32 %v132, %v324
  %v353 = vadd.f32 %v137, %v328
  %v354 = vadd.f32 %v140, %v332
  %v355 = vadd.f32 %v145, %v336
  %v356 = vadd.f32 %v148, %v340
  %v357 = vtanh.pop %v349
  %v358 = vtanh.pop %v350
  %v359 = vtanh.pop %v351
  %v360 = vtanh.pop %v352
  %v361 = vtanh.pop %v353
  %v362 = vtanh.pop %v354
  %v363 = vtanh.pop %v355
  %v364 = vtanh.pop %v356
  %v365 = vlaneseq
  %v366 = vshrl.u32 %v365, 7
  %v367 = vsub.s32 0, %v366
  %v368 = vrot.slane %v43, %v367
  %v369 = vmul.f32 %v357, %v368
  %v370 = vmul.f32 %v358, %v368
  %v371 = vmul.f32 %v359, %v368
  %v372 = vmul.f32 %v360, %v368
  %v373 = vmul.f32 %v361, %v368
  %v374 = vmul.f32 %v362, %v368
  %v375 = vmul.f32 %v363, %v368
  %v376 = vmul.f32 %v364, %v368
  %377 = vadd.xlane.f32.xlu0 %v369
  %v378 = vpop.xlane.xlu0 %377
  %379 = vadd.xlane.f32.xlu0 %v370
  %v380 = vpop.xlane.xlu0 %379
  %381 = vadd.xlane.f32.xlu0 %v371
  %v382 = vpop.xlane.xlu0 %381
  %383 = vadd.xlane.f32.xlu0 %v372
  %v384 = vpop.xlane.xlu0 %383
  %385 = vadd.xlane.f32.xlu0 %v373
  %v386 = vpop.xlane.xlu0 %385
  %387 = vadd.xlane.f32.xlu0 %v374
  %v388 = vpop.xlane.xlu0 %387
  %389 = vadd.xlane.f32.xlu0 %v375
  %v390 = vpop.xlane.xlu0 %389
  %391 = vadd.xlane.f32.xlu0 %v376
  %v392 = vpop.xlane.xlu0 %391
  %v393 = vrot.slane %v378, 4
  %v394 = vmax.f32 %v378, %v393
  %v395 = vrot.slane %v394, 2
  %v396 = vmax.f32 %v394, %v395
  %v397 = vrot.slane %v396, 1
  %v398 = vmax.f32 %v396, %v397
  %v399 = vrot.slane %v380, 4
  %v400 = vmax.f32 %v380, %v399
  %v401 = vrot.slane %v400, 2
  %v402 = vmax.f32 %v400, %v401
  %v403 = vrot.slane %v402, 1
  %v404 = vmax.f32 %v402, %v403
  %v405 = vrot.slane %v382, 4
  %v406 = vmax.f32 %v382, %v405
  %v407 = vrot.slane %v406, 2
  %v408 = vmax.f32 %v406, %v407
  %v409 = vrot.slane %v408, 1
  %v410 = vmax.f32 %v408, %v409
  %v411 = vrot.slane %v384, 4
  %v412 = vmax.f32 %v384, %v411
  %v413 = vrot.slane %v412, 2
  %v414 = vmax.f32 %v412, %v413
  %v415 = vrot.slane %v414, 1
  %v416 = vmax.f32 %v414, %v415
  %v417 = vrot.slane %v386, 4
  %v418 = vmax.f32 %v386, %v417
  %v419 = vrot.slane %v418, 2
  %v420 = vmax.f32 %v418, %v419
  %v421 = vrot.slane %v420, 1
  %v422 = vmax.f32 %v420, %v421
  %v423 = vrot.slane %v388, 4
  %v424 = vmax.f32 %v388, %v423
  %v425 = vrot.slane %v424, 2
  %v426 = vmax.f32 %v424, %v425
  %v427 = vrot.slane %v426, 1
  %v428 = vmax.f32 %v426, %v427
  %v429 = vrot.slane %v390, 4
  %v430 = vmax.f32 %v390, %v429
  %v431 = vrot.slane %v430, 2
  %v432 = vmax.f32 %v430, %v431
  %v433 = vrot.slane %v432, 1
  %v434 = vmax.f32 %v432, %v433
  %v435 = vrot.slane %v392, 4
  %v436 = vmax.f32 %v392, %v435
  %v437 = vrot.slane %v436, 2
  %v438 = vmax.f32 %v436, %v437
  %v439 = vrot.slane %v438, 1
  %v440 = vmax.f32 %v438, %v439
  %v441 = vsub.f32 %v378, %v398
  %v442 = vsub.f32 %v380, %v404
  %v443 = vsub.f32 %v382, %v410
  %v444 = vsub.f32 %v384, %v416
  %v445 = vsub.f32 %v386, %v422
  %v446 = vsub.f32 %v388, %v428
  %v447 = vsub.f32 %v390, %v434
  %v448 = vsub.f32 %v392, %v440
  %v449 = vmul.f32 %v441, 1.442695
  %v450 = vpow.pop %v449
  %v451 = vmul.f32 %v442, 1.442695
  %v452 = vpow.pop %v451
  %v453 = vmul.f32 %v443, 1.442695
  %v454 = vpow.pop %v453
  %v455 = vmul.f32 %v444, 1.442695
  %v456 = vpow.pop %v455
  %v457 = vmul.f32 %v445, 1.442695
  %v458 = vpow.pop %v457
  %v459 = vmul.f32 %v446, 1.442695
  %v460 = vpow.pop %v459
  %v461 = vmul.f32 %v447, 1.442695
  %v462 = vpow.pop %v461
  %v463 = vmul.f32 %v448, 1.442695
  %v464 = vpow.pop %v463
  %v465 = vrot.slane %v450, 4
  %v466 = vadd.f32 %v450, %v465
  %v467 = vrot.slane %v466, 2
  %v468 = vadd.f32 %v466, %v467
  %v469 = vrot.slane %v468, 1
  %v470 = vadd.f32 %v468, %v469
  %v471 = vrot.slane %v452, 4
  %v472 = vadd.f32 %v452, %v471
  %v473 = vrot.slane %v472, 2
  %v474 = vadd.f32 %v472, %v473
  %v475 = vrot.slane %v474, 1
  %v476 = vadd.f32 %v474, %v475
  %v477 = vrot.slane %v454, 4
  %v478 = vadd.f32 %v454, %v477
  %v479 = vrot.slane %v478, 2
  %v480 = vadd.f32 %v478, %v479
  %v481 = vrot.slane %v480, 1
  %v482 = vadd.f32 %v480, %v481
  %v483 = vrot.slane %v456, 4
  %v484 = vadd.f32 %v456, %v483
  %v485 = vrot.slane %v484, 2
  %v486 = vadd.f32 %v484, %v485
  %v487 = vrot.slane %v486, 1
  %v488 = vadd.f32 %v486, %v487
  %v489 = vrot.slane %v458, 4
  %v490 = vadd.f32 %v458, %v489
  %v491 = vrot.slane %v490, 2
  %v492 = vadd.f32 %v490, %v491
  %v493 = vrot.slane %v492, 1
  %v494 = vadd.f32 %v492, %v493
  %v495 = vrot.slane %v460, 4
  %v496 = vadd.f32 %v460, %v495
  %v497 = vrot.slane %v496, 2
  %v498 = vadd.f32 %v496, %v497
  %v499 = vrot.slane %v498, 1
  %v500 = vadd.f32 %v498, %v499
  %v501 = vrot.slane %v462, 4
  %v502 = vadd.f32 %v462, %v501
  %v503 = vrot.slane %v502, 2
  %v504 = vadd.f32 %v502, %v503
  %v505 = vrot.slane %v504, 1
  %v506 = vadd.f32 %v504, %v505
  %v507 = vrot.slane %v464, 4
  %v508 = vadd.f32 %v464, %v507
  %v509 = vrot.slane %v508, 2
  %v510 = vadd.f32 %v508, %v509
  %v511 = vrot.slane %v510, 1
  %v512 = vadd.f32 %v510, %v511
  %v513 = vrcp.pop %v470
  %v514 = vrcp.pop %v476
  %v515 = vrcp.pop %v482
  %v516 = vrcp.pop %v488
  %v517 = vrcp.pop %v494
  %v518 = vrcp.pop %v500
  %v519 = vrcp.pop %v506
  %v520 = vrcp.pop %v512
  %v521 = vmul.f32 %v450, %v513
  %v522 = vmul.f32 %v452, %v514
  %v523 = vmul.f32 %v454, %v515
  %v524 = vmul.f32 %v456, %v516
  %v525 = vmul.f32 %v458, %v517
  %v526 = vmul.f32 %v460, %v518
  %v527 = vmul.f32 %v462, %v519
  %v528 = vmul.f32 %v464, %v520
  %v529 = vmul.f32 %v45, %v521
  %v530 = vmul.f32 %v46, %v522
  %v531 = vmul.f32 %v47, %v523
  %v532 = vmul.f32 %v48, %v524
  %v533 = vmul.f32 %v49, %v525
  %v534 = vmul.f32 %v50, %v526
  %v535 = vmul.f32 %v51, %v527
  %v536 = vmul.f32 %v52, %v528
  %v537 = vsel %vm73, %v529, 0.0
  %v538 = vrot.slane %v537, 4
  %v539 = vadd.f32 %v537, %v538
  %v540 = vrot.slane %v539, 2
  %v541 = vadd.f32 %v539, %v540
  %v542 = vrot.slane %v541, 1
  %v543 = vadd.f32 %v541, %v542
  %v544 = vsel %vm73, %v530, 0.0
  %v545 = vrot.slane %v544, 4
  %v546 = vadd.f32 %v544, %v545
  %v547 = vrot.slane %v546, 2
  %v548 = vadd.f32 %v546, %v547
  %v549 = vrot.slane %v548, 1
  %v550 = vadd.f32 %v548, %v549
  %v551 = vsel %vm73, %v531, 0.0
  %v552 = vrot.slane %v551, 4
  %v553 = vadd.f32 %v551, %v552
  %v554 = vrot.slane %v553, 2
  %v555 = vadd.f32 %v553, %v554
  %v556 = vrot.slane %v555, 1
  %v557 = vadd.f32 %v555, %v556
  %v558 = vsel %vm73, %v532, 0.0
  %v559 = vrot.slane %v558, 4
  %v560 = vadd.f32 %v558, %v559
  %v561 = vrot.slane %v560, 2
  %v562 = vadd.f32 %v560, %v561
  %v563 = vrot.slane %v562, 1
  %v564 = vadd.f32 %v562, %v563
  %v565 = vsel %vm73, %v533, 0.0
  %v566 = vrot.slane %v565, 4
  %v567 = vadd.f32 %v565, %v566
  %v568 = vrot.slane %v567, 2
  %v569 = vadd.f32 %v567, %v568
  %v570 = vrot.slane %v569, 1
  %v571 = vadd.f32 %v569, %v570
  %v572 = vsel %vm73, %v534, 0.0
  %v573 = vrot.slane %v572, 4
  %v574 = vadd.f32 %v572, %v573
  %v575 = vrot.slane %v574, 2
  %v576 = vadd.f32 %v574, %v575
  %v577 = vrot.slane %v576, 1
  %v578 = vadd.f32 %v576, %v577
  %v579 = vsel %vm73, %v535, 0.0
  %v580 = vrot.slane %v579, 4
  %v581 = vadd.f32 %v579, %v580
  %v582 = vrot.slane %v581, 2
  %v583 = vadd.f32 %v581, %v582
  %v584 = vrot.slane %v583, 1
  %v585 = vadd.f32 %v583, %v584
  %v586 = vsel %vm73, %v536, 0.0
  %v587 = vrot.slane %v586, 4
  %v588 = vadd.f32 %v586, %v587
  %v589 = vrot.slane %v588, 2
  %v590 = vadd.f32 %v588, %v589
  %v591 = vrot.slane %v590, 1
  %v592 = vadd.f32 %v590, %v591
  %v593 = vld [vmem:[%s1] sm:$0xff]
  %v594 = vld [vmem:[%s1 + $0x8] sm:$0xff]
  %v595 = vld [vmem:[%s1 + $0x10] sm:$0xff]
  %v596 = vld [vmem:[%s1 + $0x18] sm:$0xff]
  %v597 = vld [vmem:[%s1 + $0x20] sm:$0xff]
  %v598 = vld [vmem:[%s1 + $0x28] sm:$0xff]
  %v599 = vld [vmem:[%s1 + $0x30] sm:$0xff]
  %v600 = vld [vmem:[%s1 + $0x38] sm:$0xff]
  %v601 = vpack.c.bf16 %v594, %v593
  %v602 = vpack.c.bf16 %v596, %v595
  %v603 = vpack.c.bf16 %v598, %v597
  %v604 = vpack.c.bf16 %v600, %v599
  %v605 = vld [vmem:[%s4] sm:$0xf]
  %v606 = vld [vmem:[%s4 + $0x4] sm:$0xf]
  %v607 = vld [vmem:[%s4 + $0x8] sm:$0xf]
  %v611 = vunpack.c.l.b16 %v605
  %v612 = vunpack.c.l.b16 %v606
  %v613 = vunpack.c.l.b16 %v607
  %v614 = vpack.c.b16 %v612, %v611
  %v615 = vpack.c.b16 %v613, %v613
  %vm617 = vcmask 195584
  %v619 = vsel %vm617, %v601, 0
  %v622 = vsel %vm617, %v602, 0
  %v625 = vsel %vm617, %v603, 0
  %v628 = vsel %vm617, %v604, 0
  %vm630 = vcmask 1043456
  %v632 = vsel %vm630, %v615, 0
  %634 = vmatprep.subr.bf16.mxu0 0
  %635 = vmatpush1.bf16.msra.mxu0 %v614
  %636 = vmatprep.subr.bf16.mxu0 0
  %637 = vmatpush1.bf16.msra.mxu0 %v632
  %638 = vmatprep.subr.bf16.mxu0 0
  %639 = vmatpush1.bf16.msra.mxu0 0
  %640 = vmatprep.subr.bf16.mxu0 0
  %641 = vmatpush1.bf16.msra.mxu0 0
  %642 = vmatprep.subr.bf16.mxu0 0
  %643 = vmatpush1.bf16.msra.mxu0 0
  %644 = vmatprep.subr.bf16.mxu0 0
  %645 = vmatpush1.bf16.msra.mxu0 0
  %646 = vmatprep.subr.bf16.mxu0 0
  %647 = vmatpush1.bf16.msra.mxu0 0
  %648 = vmatprep.subr.bf16.mxu0 0
  %649 = vmatpush1.bf16.msra.mxu0 0
  %650 = vmatprep.subr.bf16.mxu0 0
  %651 = vmatpush1.bf16.msra.mxu0 0
  %652 = vmatprep.subr.bf16.mxu0 0
  %653 = vmatpush1.bf16.msra.mxu0 0
  %654 = vmatprep.subr.bf16.mxu0 0
  %655 = vmatpush1.bf16.msra.mxu0 0
  %656 = vmatprep.subr.bf16.mxu0 0
  %657 = vmatpush1.bf16.msra.mxu0 0
  %658 = vmatprep.subr.bf16.mxu0 0
  %659 = vmatpush1.bf16.msra.mxu0 0
  %660 = vmatprep.subr.bf16.mxu0 0
  %661 = vmatpush1.bf16.msra.mxu0 0
  %662 = vmatprep.subr.bf16.mxu0 0
  %663 = vmatpush1.bf16.msra.mxu0 0
  %664 = vmatprep.subr.bf16.mxu0 0
  %665 = vmatpush1.bf16.msra.mxu0 0
  %666 = vmatprep.mubr.bf16.mxu0 0
  %667 = vmatmul.mubr.bf16.gmra.mrb[0].mxu0 %v619
  %v668 = vpop.f32.mrb[0].mxu0
  %v669 = vadd.f32 0.0, %v668
  %v670 = vpop.f32.mrb[0].mxu0
  %v671 = vpop.f32.mrb[0].mxu0
  %v672 = vadd.f32 0.0, %v671
  %v673 = vpop.f32.mrb[0].mxu0
  %674 = vmatprep.mubr.bf16.mxu0 0
  %675 = vmatmul.mubr.bf16.gmra.mrb[0].mxu0 %v622
  %v676 = vpop.f32.mrb[0].mxu0
  %v677 = vadd.f32 0.0, %v676
  %v678 = vpop.f32.mrb[0].mxu0
  %v679 = vpop.f32.mrb[0].mxu0
  %v680 = vadd.f32 0.0, %v679
  %v681 = vpop.f32.mrb[0].mxu0
  %682 = vmatprep.mubr.bf16.mxu0 0
  %683 = vmatmul.mubr.bf16.gmra.mrb[0].mxu0 %v625
  %v684 = vpop.f32.mrb[0].mxu0
  %v685 = vadd.f32 0.0, %v684
  %v686 = vpop.f32.mrb[0].mxu0
  %v687 = vpop.f32.mrb[0].mxu0
  %v688 = vadd.f32 0.0, %v687
  %v689 = vpop.f32.mrb[0].mxu0
  %690 = vmatprep.mubr.bf16.mxu0 0
  %691 = vmatmul.mubr.bf16.gmra.mrb[0].mxu0 %v628
  %v692 = vpop.f32.mrb[0].mxu0
  %v693 = vadd.f32 0.0, %v692
  %v694 = vpop.f32.mrb[0].mxu0
  %v695 = vpop.f32.mrb[0].mxu0
  %v696 = vadd.f32 0.0, %v695
  %v697 = vpop.f32.mrb[0].mxu0
  %698 = vdwg.mxu0
  %v699 = vld [vmem:[%s6] sm:$0xf]
  %v700 = vld [vmem:[%s6 + $0x4] sm:$0xf]
  %v701 = vld [vmem:[%s6 + $0x8] sm:$0xf]
  %v702 = vld [vmem:[%s6 + $0xc] sm:$0xf]
  %v703 = vld [vmem:[%s6 + $0x10] sm:$0xf]
  %v704 = vld [vmem:[%s6 + $0x14] sm:$0xf]
  %v705 = vld [vmem:[%s6 + $0x18] sm:$0xf]
  %v706 = vld [vmem:[%s6 + $0x1c] sm:$0xf]
  %v707 = vld [vmem:[%s6 + $0x20] sm:$0xf]
  %v708 = vld [vmem:[%s6 + $0x24] sm:$0xf]
  %v709 = vld [vmem:[%s6 + $0x28] sm:$0xf]
  %v710 = vld [vmem:[%s6 + $0x2c] sm:$0xf]
  %v711 = vld [vmem:[%s6 + $0x30] sm:$0xf]
  %v712 = vld [vmem:[%s6 + $0x34] sm:$0xf]
  %v713 = vld [vmem:[%s6 + $0x38] sm:$0xf]
  %v714 = vld [vmem:[%s6 + $0x3c] sm:$0xf]
  %v715 = vlaneseq
  %v716 = vshrl.u32 %v715, 7
  %v717 = vsub.s32 0, %v716
  %v718 = vrot.slane %v42, %v717
  %v735 = vunpack.c.l.b16 %v699
  %v736 = vunpack.c.l.b16 %v700
  %v737 = vunpack.c.l.b16 %v701
  %v738 = vunpack.c.l.b16 %v702
  %v739 = vunpack.c.l.b16 %v703
  %v740 = vunpack.c.l.b16 %v704
  %v741 = vunpack.c.l.b16 %v705
  %v742 = vunpack.c.l.b16 %v706
  %v743 = vunpack.c.l.b16 %v707
  %v744 = vunpack.c.l.b16 %v708
  %v745 = vunpack.c.l.b16 %v709
  %v746 = vunpack.c.l.b16 %v710
  %v747 = vunpack.c.l.b16 %v711
  %v748 = vunpack.c.l.b16 %v712
  %v749 = vunpack.c.l.b16 %v713
  %v750 = vunpack.c.l.b16 %v714
  %v751 = vpack.c.b16 %v736, %v735
  %v752 = vpack.c.b16 %v738, %v737
  %v753 = vpack.c.b16 %v740, %v739
  %v754 = vpack.c.b16 %v742, %v741
  %v755 = vpack.c.b16 %v744, %v743
  %v756 = vpack.c.b16 %v746, %v745
  %v757 = vpack.c.b16 %v748, %v747
  %v758 = vpack.c.b16 %v750, %v749
  %767 = vmatprep.subr.bf16.mxu0 0
  %768 = vmatpush1.bf16.msra.mxu0 %v751
  %769 = vmatprep.subr.bf16.mxu0 0
  %770 = vmatpush1.bf16.msra.mxu0 %v752
  %771 = vmatprep.subr.bf16.mxu0 0
  %772 = vmatpush1.bf16.msra.mxu0 %v753
  %773 = vmatprep.subr.bf16.mxu0 0
  %774 = vmatpush1.bf16.msra.mxu0 %v754
  %775 = vmatprep.subr.bf16.mxu0 0
  %776 = vmatpush1.bf16.msra.mxu0 %v755
  %777 = vmatprep.subr.bf16.mxu0 0
  %778 = vmatpush1.bf16.msra.mxu0 %v756
  %779 = vmatprep.subr.bf16.mxu0 0
  %780 = vmatpush1.bf16.msra.mxu0 %v757
  %781 = vmatprep.subr.bf16.mxu0 0
  %782 = vmatpush1.bf16.msra.mxu0 %v758
  %783 = vmatprep.subr.bf16.mxu0 0
  %784 = vmatpush1.bf16.msra.mxu0 0
  %785 = vmatprep.subr.bf16.mxu0 0
  %786 = vmatpush1.bf16.msra.mxu0 0
  %787 = vmatprep.subr.bf16.mxu0 0
  %788 = vmatpush1.bf16.msra.mxu0 0
  %789 = vmatprep.subr.bf16.mxu0 0
  %790 = vmatpush1.bf16.msra.mxu0 0
  %791 = vmatprep.subr.bf16.mxu0 0
  %792 = vmatpush1.bf16.msra.mxu0 0
  %793 = vmatprep.subr.bf16.mxu0 0
  %794 = vmatpush1.bf16.msra.mxu0 0
  %795 = vmatprep.subr.bf16.mxu0 0
  %796 = vmatpush1.bf16.msra.mxu0 0
  %797 = vmatprep.subr.bf16.mxu0 0
  %798 = vmatpush1.bf16.msra.mxu0 0
  %799 = vmatprep.mubr.bf16.mxu0 0
  %800 = vmatmul.mubr.bf16.gmra.mrb[0].mxu0 %v40
  %v801 = vpop.f32.mrb[0].mxu0
  %v802 = vadd.f32 %v718, %v801
  %v803 = vpop.f32.mrb[0].mxu0
  %v804 = vpop.f32.mrb[0].mxu0
  %v805 = vpop.f32.mrb[0].mxu0
  %806 = vdwg.mxu0
  %v808 = vcombine.high %v802, %v802
  %v810 = vunpack.c.l.s4 1966171168
  %v811 = vunpack.c.0.s8 %v810
  %v812 = vlaneseq
  %v813 = vshrl.u32 %v812, 7
  %v814 = vsub.s32 %v811, %v813
  %v815 = vrot.slane %v802, %v814
  %v817 = vunpack.c.l.s4 1966171168
  %v818 = vunpack.c.0.s8 %v817
  %v819 = vlaneseq
  %v820 = vshrl.u32 %v819, 7
  %v821 = vsub.s32 %v818, %v820
  %v822 = vrot.slane %v808, %v821
  %v823 = vcombine.high %v815, %v815
  %v824 = vcombine.high %v822, %v822
  %v826 = vunpack.c.l.s4 1966171168
  %v827 = vunpack.c.0.s8 %v826
  %v828 = vlaneseq
  %v829 = vshrl.u32 %v828, 7
  %v830 = vsub.s32 %v827, %v829
  %v831 = vrot.slane %v815, %v830
  %v833 = vunpack.c.l.s4 1966171168
  %v834 = vunpack.c.0.s8 %v833
  %v835 = vlaneseq
  %v836 = vshrl.u32 %v835, 7
  %v837 = vsub.s32 %v834, %v836
  %v838 = vrot.slane %v822, %v837
  %v840 = vunpack.c.l.s4 1966171168
  %v841 = vunpack.c.0.s8 %v840
  %v842 = vlaneseq
  %v843 = vshrl.u32 %v842, 7
  %v844 = vsub.s32 %v841, %v843
  %v845 = vrot.slane %v823, %v844
  %v847 = vunpack.c.l.s4 1966171168
  %v848 = vunpack.c.0.s8 %v847
  %v849 = vlaneseq
  %v850 = vshrl.u32 %v849, 7
  %v851 = vsub.s32 %v848, %v850
  %v852 = vrot.slane %v824, %v851
  %v853 = vcombine.high %v831, %v831
  %v854 = vcombine.high %v838, %v838
  %v855 = vcombine.high %v845, %v845
  %v856 = vcombine.high %v852, %v852
  %v857 = vlaneseq
  %v858 = vshrl.u32 %v857, 7
  %v859 = vsub.s32 0, %v858
  %v860 = vrot.slane %v831, %v859
  %v861 = vlaneseq
  %v862 = vshrl.u32 %v861, 7
  %v863 = vsub.s32 0, %v862
  %v864 = vrot.slane %v845, %v863
  %v865 = vlaneseq
  %v866 = vshrl.u32 %v865, 7
  %v867 = vsub.s32 0, %v866
  %v868 = vrot.slane %v853, %v867
  %v869 = vlaneseq
  %v870 = vshrl.u32 %v869, 7
  %v871 = vsub.s32 0, %v870
  %v872 = vrot.slane %v855, %v871
  %v873 = vlaneseq
  %v874 = vshrl.u32 %v873, 7
  %v875 = vsub.s32 0, %v874
  %v876 = vrot.slane %v838, %v875
  %v877 = vlaneseq
  %v878 = vshrl.u32 %v877, 7
  %v879 = vsub.s32 0, %v878
  %v880 = vrot.slane %v852, %v879
  %v881 = vlaneseq
  %v882 = vshrl.u32 %v881, 7
  %v883 = vsub.s32 0, %v882
  %v884 = vrot.slane %v854, %v883
  %v885 = vlaneseq
  %v886 = vshrl.u32 %v885, 7
  %v887 = vsub.s32 0, %v886
  %v888 = vrot.slane %v856, %v887
  %v897 = vadd.f32 %v669, %v860
  %v898 = vadd.f32 %v672, %v864
  %v899 = vadd.f32 %v677, %v868
  %v900 = vadd.f32 %v680, %v872
  %v901 = vadd.f32 %v685, %v876
  %v902 = vadd.f32 %v688, %v880
  %v903 = vadd.f32 %v693, %v884
  %v904 = vadd.f32 %v696, %v888
  %v905 = vtanh.pop %v897
  %v906 = vtanh.pop %v898
  %v907 = vtanh.pop %v899
  %v908 = vtanh.pop %v900
  %v909 = vtanh.pop %v901
  %v910 = vtanh.pop %v902
  %v911 = vtanh.pop %v903
  %v912 = vtanh.pop %v904
  %v913 = vlaneseq
  %v914 = vshrl.u32 %v913, 7
  %v915 = vsub.s32 0, %v914
  %v916 = vrot.slane %v44, %v915
  %v917 = vmul.f32 %v905, %v916
  %v918 = vmul.f32 %v906, %v916
  %v919 = vmul.f32 %v907, %v916
  %v920 = vmul.f32 %v908, %v916
  %v921 = vmul.f32 %v909, %v916
  %v922 = vmul.f32 %v910, %v916
  %v923 = vmul.f32 %v911, %v916
  %v924 = vmul.f32 %v912, %v916
  %925 = vadd.xlane.f32.xlu0 %v917
  %v926 = vpop.xlane.xlu0 %925
  %927 = vadd.xlane.f32.xlu0 %v918
  %v928 = vpop.xlane.xlu0 %927
  %929 = vadd.xlane.f32.xlu0 %v919
  %v930 = vpop.xlane.xlu0 %929
  %931 = vadd.xlane.f32.xlu0 %v920
  %v932 = vpop.xlane.xlu0 %931
  %933 = vadd.xlane.f32.xlu0 %v921
  %v934 = vpop.xlane.xlu0 %933
  %935 = vadd.xlane.f32.xlu0 %v922
  %v936 = vpop.xlane.xlu0 %935
  %937 = vadd.xlane.f32.xlu0 %v923
  %v938 = vpop.xlane.xlu0 %937
  %939 = vadd.xlane.f32.xlu0 %v924
  %v940 = vpop.xlane.xlu0 %939
  %v941 = vlaneseq
  %v942 = vshrl.u32 %v941, 7
  %vm943 = vcmp.lt.s32.totalorder %v942, 6
  %v944 = vsel %vm943, 1, 0
  %vm945 = vcmp.eq.s32.totalorder %v944, 1
  %v946 = vsel %vm945, %v926, -1e+30
  %v947 = vsel %vm945, %v928, -1e+30
  %v948 = vsel %vm945, %v930, -1e+30
  %v949 = vsel %vm945, %v932, -1e+30
  %v950 = vsel %vm945, %v934, -1e+30
  %v951 = vsel %vm945, %v936, -1e+30
  %v952 = vsel %vm945, %v938, -1e+30
  %v953 = vsel %vm945, %v940, -1e+30
  %v954 = vrot.slane %v946, 4
  %v955 = vmax.f32 %v946, %v954
  %v956 = vrot.slane %v955, 2
  %v957 = vmax.f32 %v955, %v956
  %v958 = vrot.slane %v957, 1
  %v959 = vmax.f32 %v957, %v958
  %v960 = vrot.slane %v947, 4
  %v961 = vmax.f32 %v947, %v960
  %v962 = vrot.slane %v961, 2
  %v963 = vmax.f32 %v961, %v962
  %v964 = vrot.slane %v963, 1
  %v965 = vmax.f32 %v963, %v964
  %v966 = vrot.slane %v948, 4
  %v967 = vmax.f32 %v948, %v966
  %v968 = vrot.slane %v967, 2
  %v969 = vmax.f32 %v967, %v968
  %v970 = vrot.slane %v969, 1
  %v971 = vmax.f32 %v969, %v970
  %v972 = vrot.slane %v949, 4
  %v973 = vmax.f32 %v949, %v972
  %v974 = vrot.slane %v973, 2
  %v975 = vmax.f32 %v973, %v974
  %v976 = vrot.slane %v975, 1
  %v977 = vmax.f32 %v975, %v976
  %v978 = vrot.slane %v950, 4
  %v979 = vmax.f32 %v950, %v978
  %v980 = vrot.slane %v979, 2
  %v981 = vmax.f32 %v979, %v980
  %v982 = vrot.slane %v981, 1
  %v983 = vmax.f32 %v981, %v982
  %v984 = vrot.slane %v951, 4
  %v985 = vmax.f32 %v951, %v984
  %v986 = vrot.slane %v985, 2
  %v987 = vmax.f32 %v985, %v986
  %v988 = vrot.slane %v987, 1
  %v989 = vmax.f32 %v987, %v988
  %v990 = vrot.slane %v952, 4
  %v991 = vmax.f32 %v952, %v990
  %v992 = vrot.slane %v991, 2
  %v993 = vmax.f32 %v991, %v992
  %v994 = vrot.slane %v993, 1
  %v995 = vmax.f32 %v993, %v994
  %v996 = vrot.slane %v953, 4
  %v997 = vmax.f32 %v953, %v996
  %v998 = vrot.slane %v997, 2
  %v999 = vmax.f32 %v997, %v998
  %v1000 = vrot.slane %v999, 1
  %v1001 = vmax.f32 %v999, %v1000
  %v1002 = vsub.f32 %v946, %v959
  %v1003 = vsub.f32 %v947, %v965
  %v1004 = vsub.f32 %v948, %v971
  %v1005 = vsub.f32 %v949, %v977
  %v1006 = vsub.f32 %v950, %v983
  %v1007 = vsub.f32 %v951, %v989
  %v1008 = vsub.f32 %v952, %v995
  %v1009 = vsub.f32 %v953, %v1001
  %v1010 = vmul.f32 %v1002, 1.442695
  %v1011 = vpow.pop %v1010
  %v1012 = vmul.f32 %v1003, 1.442695
  %v1013 = vpow.pop %v1012
  %v1014 = vmul.f32 %v1004, 1.442695
  %v1015 = vpow.pop %v1014
  %v1016 = vmul.f32 %v1005, 1.442695
  %v1017 = vpow.pop %v1016
  %v1018 = vmul.f32 %v1006, 1.442695
  %v1019 = vpow.pop %v1018
  %v1020 = vmul.f32 %v1007, 1.442695
  %v1021 = vpow.pop %v1020
  %v1022 = vmul.f32 %v1008, 1.442695
  %v1023 = vpow.pop %v1022
  %v1024 = vmul.f32 %v1009, 1.442695
  %v1025 = vpow.pop %v1024
  %v1026 = vrot.slane %v1011, 4
  %v1027 = vadd.f32 %v1011, %v1026
  %v1028 = vrot.slane %v1027, 2
  %v1029 = vadd.f32 %v1027, %v1028
  %v1030 = vrot.slane %v1029, 1
  %v1031 = vadd.f32 %v1029, %v1030
  %v1032 = vrot.slane %v1013, 4
  %v1033 = vadd.f32 %v1013, %v1032
  %v1034 = vrot.slane %v1033, 2
  %v1035 = vadd.f32 %v1033, %v1034
  %v1036 = vrot.slane %v1035, 1
  %v1037 = vadd.f32 %v1035, %v1036
  %v1038 = vrot.slane %v1015, 4
  %v1039 = vadd.f32 %v1015, %v1038
  %v1040 = vrot.slane %v1039, 2
  %v1041 = vadd.f32 %v1039, %v1040
  %v1042 = vrot.slane %v1041, 1
  %v1043 = vadd.f32 %v1041, %v1042
  %v1044 = vrot.slane %v1017, 4
  %v1045 = vadd.f32 %v1017, %v1044
  %v1046 = vrot.slane %v1045, 2
  %v1047 = vadd.f32 %v1045, %v1046
  %v1048 = vrot.slane %v1047, 1
  %v1049 = vadd.f32 %v1047, %v1048
  %v1050 = vrot.slane %v1019, 4
  %v1051 = vadd.f32 %v1019, %v1050
  %v1052 = vrot.slane %v1051, 2
  %v1053 = vadd.f32 %v1051, %v1052
  %v1054 = vrot.slane %v1053, 1
  %v1055 = vadd.f32 %v1053, %v1054
  %v1056 = vrot.slane %v1021, 4
  %v1057 = vadd.f32 %v1021, %v1056
  %v1058 = vrot.slane %v1057, 2
  %v1059 = vadd.f32 %v1057, %v1058
  %v1060 = vrot.slane %v1059, 1
  %v1061 = vadd.f32 %v1059, %v1060
  %v1062 = vrot.slane %v1023, 4
  %v1063 = vadd.f32 %v1023, %v1062
  %v1064 = vrot.slane %v1063, 2
  %v1065 = vadd.f32 %v1063, %v1064
  %v1066 = vrot.slane %v1065, 1
  %v1067 = vadd.f32 %v1065, %v1066
  %v1068 = vrot.slane %v1025, 4
  %v1069 = vadd.f32 %v1025, %v1068
  %v1070 = vrot.slane %v1069, 2
  %v1071 = vadd.f32 %v1069, %v1070
  %v1072 = vrot.slane %v1071, 1
  %v1073 = vadd.f32 %v1071, %v1072
  %v1074 = vrcp.pop %v1031
  %v1075 = vrcp.pop %v1037
  %v1076 = vrcp.pop %v1043
  %v1077 = vrcp.pop %v1049
  %v1078 = vrcp.pop %v1055
  %v1079 = vrcp.pop %v1061
  %v1080 = vrcp.pop %v1067
  %v1081 = vrcp.pop %v1073
  %v1082 = vmul.f32 %v1011, %v1074
  %v1083 = vmul.f32 %v1013, %v1075
  %v1084 = vmul.f32 %v1015, %v1076
  %v1085 = vmul.f32 %v1017, %v1077
  %v1086 = vmul.f32 %v1019, %v1078
  %v1087 = vmul.f32 %v1021, %v1079
  %v1088 = vmul.f32 %v1023, %v1080
  %v1089 = vmul.f32 %v1025, %v1081
  %v1090 = vmul.f32 %v593, %v1082
  %v1091 = vmul.f32 %v594, %v1083
  %v1092 = vmul.f32 %v595, %v1084
  %v1093 = vmul.f32 %v596, %v1085
  %v1094 = vmul.f32 %v597, %v1086
  %v1095 = vmul.f32 %v598, %v1087
  %v1096 = vmul.f32 %v599, %v1088
  %v1097 = vmul.f32 %v600, %v1089
  %v1098 = vsel %vm617, %v1090, 0.0
  %v1099 = vrot.slane %v1098, 4
  %v1100 = vadd.f32 %v1098, %v1099
  %v1101 = vrot.slane %v1100, 2
  %v1102 = vadd.f32 %v1100, %v1101
  %v1103 = vrot.slane %v1102, 1
  %v1104 = vadd.f32 %v1102, %v1103
  %v1105 = vsel %vm617, %v1091, 0.0
  %v1106 = vrot.slane %v1105, 4
  %v1107 = vadd.f32 %v1105, %v1106
  %v1108 = vrot.slane %v1107, 2
  %v1109 = vadd.f32 %v1107, %v1108
  %v1110 = vrot.slane %v1109, 1
  %v1111 = vadd.f32 %v1109, %v1110
  %v1112 = vsel %vm617, %v1092, 0.0
  %v1113 = vrot.slane %v1112, 4
  %v1114 = vadd.f32 %v1112, %v1113
  %v1115 = vrot.slane %v1114, 2
  %v1116 = vadd.f32 %v1114, %v1115
  %v1117 = vrot.slane %v1116, 1
  %v1118 = vadd.f32 %v1116, %v1117
  %v1119 = vsel %vm617, %v1093, 0.0
  %v1120 = vrot.slane %v1119, 4
  %v1121 = vadd.f32 %v1119, %v1120
  %v1122 = vrot.slane %v1121, 2
  %v1123 = vadd.f32 %v1121, %v1122
  %v1124 = vrot.slane %v1123, 1
  %v1125 = vadd.f32 %v1123, %v1124
  %v1126 = vsel %vm617, %v1094, 0.0
  %v1127 = vrot.slane %v1126, 4
  %v1128 = vadd.f32 %v1126, %v1127
  %v1129 = vrot.slane %v1128, 2
  %v1130 = vadd.f32 %v1128, %v1129
  %v1131 = vrot.slane %v1130, 1
  %v1132 = vadd.f32 %v1130, %v1131
  %v1133 = vsel %vm617, %v1095, 0.0
  %v1134 = vrot.slane %v1133, 4
  %v1135 = vadd.f32 %v1133, %v1134
  %v1136 = vrot.slane %v1135, 2
  %v1137 = vadd.f32 %v1135, %v1136
  %v1138 = vrot.slane %v1137, 1
  %v1139 = vadd.f32 %v1137, %v1138
  %v1140 = vsel %vm617, %v1096, 0.0
  %v1141 = vrot.slane %v1140, 4
  %v1142 = vadd.f32 %v1140, %v1141
  %v1143 = vrot.slane %v1142, 2
  %v1144 = vadd.f32 %v1142, %v1143
  %v1145 = vrot.slane %v1144, 1
  %v1146 = vadd.f32 %v1144, %v1145
  %v1147 = vsel %vm617, %v1097, 0.0
  %v1148 = vrot.slane %v1147, 4
  %v1149 = vadd.f32 %v1147, %v1148
  %v1150 = vrot.slane %v1149, 2
  %v1151 = vadd.f32 %v1149, %v1150
  %v1152 = vrot.slane %v1151, 1
  %v1153 = vadd.f32 %v1151, %v1152
  %v1154 = vpack.c.bf16 %v543, %v543
  %v1155 = vpack.c.bf16 %v550, %v550
  %v1156 = vpack.c.bf16 %v557, %v557
  %v1157 = vpack.c.bf16 %v564, %v564
  %v1158 = vpack.c.bf16 %v571, %v571
  %v1159 = vpack.c.bf16 %v578, %v578
  %v1160 = vpack.c.bf16 %v585, %v585
  %v1161 = vpack.c.bf16 %v592, %v592
  %v1162 = vld [vmem:[%s8] sm:$0xf]
  %v1163 = vld [vmem:[%s8 + $0x4] sm:$0xf]
  %v1164 = vld [vmem:[%s8 + $0x8] sm:$0xf]
  %v1165 = vld [vmem:[%s8 + $0xc] sm:$0xf]
  %v1166 = vpack.c.bf16 %v1104, %v1104
  %v1167 = vpack.c.bf16 %v1111, %v1111
  %v1168 = vpack.c.bf16 %v1118, %v1118
  %v1169 = vpack.c.bf16 %v1125, %v1125
  %v1170 = vpack.c.bf16 %v1132, %v1132
  %v1171 = vpack.c.bf16 %v1139, %v1139
  %v1172 = vpack.c.bf16 %v1146, %v1146
  %v1173 = vpack.c.bf16 %v1153, %v1153
  %v1174 = vld [vmem:[%s9] sm:$0xf]
  %v1175 = vld [vmem:[%s9 + $0x4] sm:$0xf]
  %v1176 = vld [vmem:[%s9 + $0x8] sm:$0xf]
  %v1185 = vunpack.c.l.b16 %v1166
  %v1186 = vunpack.c.l.b16 %v1167
  %v1187 = vunpack.c.l.b16 %v1168
  %v1188 = vunpack.c.l.b16 %v1169
  %v1189 = vunpack.c.l.b16 %v1170
  %v1190 = vunpack.c.l.b16 %v1171
  %v1191 = vunpack.c.l.b16 %v1172
  %v1192 = vunpack.c.l.b16 %v1173
  %vm1193 = vcmask 1041409
  %v1194 = vsel %vm1193, %v1186, %v1185
  %vm1195 = vcmask 1042434
  %v1196 = vsel %vm1195, %v1187, %v1194
  %vm1197 = vcmask 1043459
  %v1198 = vsel %vm1197, %v1188, %v1196
  %vm1199 = vcmask 1044484
  %v1200 = vsel %vm1199, %v1189, %v1198
  %vm1201 = vcmask 1045509
  %v1202 = vsel %vm1201, %v1190, %v1200
  %vm1203 = vcmask 1046534
  %v1204 = vsel %vm1203, %v1191, %v1202
  %vm1205 = vcmask 1047559
  %v1206 = vsel %vm1205, %v1192, %v1204
  %v1207 = vpack.c.b16 %v1206, %v1206
  %v1211 = vunpack.c.l.b16 %v1174
  %v1212 = vunpack.c.l.b16 %v1175
  %v1213 = vunpack.c.l.b16 %v1176
  %v1214 = vpack.c.b16 %v1212, %v1211
  %v1215 = vpack.c.b16 %v1213, %v1213
  %v1218 = vsel %vm617, %v1207, 0
  %v1221 = vsel %vm630, %v1215, 0
  %1223 = vmatprep.subr.bf16.mxu0 0
  %1224 = vmatpush1.bf16.msra.mxu0 %v1214
  %1225 = vmatprep.subr.bf16.mxu0 0
  %1226 = vmatpush1.bf16.msra.mxu0 %v1221
  %1227 = vmatprep.subr.bf16.mxu0 0
  %1228 = vmatpush1.bf16.msra.mxu0 0
  %1229 = vmatprep.subr.bf16.mxu0 0
  %1230 = vmatpush1.bf16.msra.mxu0 0
  %1231 = vmatprep.subr.bf16.mxu0 0
  %1232 = vmatpush1.bf16.msra.mxu0 0
  %1233 = vmatprep.subr.bf16.mxu0 0
  %1234 = vmatpush1.bf16.msra.mxu0 0
  %1235 = vmatprep.subr.bf16.mxu0 0
  %1236 = vmatpush1.bf16.msra.mxu0 0
  %1237 = vmatprep.subr.bf16.mxu0 0
  %1238 = vmatpush1.bf16.msra.mxu0 0
  %1239 = vmatprep.subr.bf16.mxu0 0
  %1240 = vmatpush1.bf16.msra.mxu0 0
  %1241 = vmatprep.subr.bf16.mxu0 0
  %1242 = vmatpush1.bf16.msra.mxu0 0
  %1243 = vmatprep.subr.bf16.mxu0 0
  %1244 = vmatpush1.bf16.msra.mxu0 0
  %1245 = vmatprep.subr.bf16.mxu0 0
  %1246 = vmatpush1.bf16.msra.mxu0 0
  %1247 = vmatprep.subr.bf16.mxu0 0
  %1248 = vmatpush1.bf16.msra.mxu0 0
  %1249 = vmatprep.subr.bf16.mxu0 0
  %1250 = vmatpush1.bf16.msra.mxu0 0
  %1251 = vmatprep.subr.bf16.mxu0 0
  %1252 = vmatpush1.bf16.msra.mxu0 0
  %1253 = vmatprep.subr.bf16.mxu0 0
  %1254 = vmatpush1.bf16.msra.mxu0 0
  %1255 = vmatprep.mubr.bf16.mxu0 0
  %1256 = vmatmul.mubr.bf16.gmra.mrb[0].mxu0 %v1218
  %v1257 = vpop.f32.mrb[0].mxu0
  %v1258 = vadd.f32 0.0, %v1257
  %v1259 = vpop.f32.mrb[0].mxu0
  %v1260 = vpop.f32.mrb[0].mxu0
  %v1261 = vpop.f32.mrb[0].mxu0
  %1262 = vdwg.mxu0
  %v1271 = vunpack.c.l.b16 %v1154
  %v1272 = vunpack.c.l.b16 %v1155
  %v1273 = vunpack.c.l.b16 %v1156
  %v1274 = vunpack.c.l.b16 %v1157
  %v1275 = vunpack.c.l.b16 %v1158
  %v1276 = vunpack.c.l.b16 %v1159
  %v1277 = vunpack.c.l.b16 %v1160
  %v1278 = vunpack.c.l.b16 %v1161
  %v1279 = vsel %vm1193, %v1272, %v1271
  %v1280 = vsel %vm1195, %v1273, %v1279
  %v1281 = vsel %vm1197, %v1274, %v1280
  %v1282 = vsel %vm1199, %v1275, %v1281
  %v1283 = vsel %vm1201, %v1276, %v1282
  %v1284 = vsel %vm1203, %v1277, %v1283
  %v1285 = vsel %vm1205, %v1278, %v1284
  %v1286 = vpack.c.b16 %v1285, %v1285
  %v1291 = vunpack.c.l.b16 %v1162
  %v1292 = vunpack.c.l.b16 %v1163
  %v1293 = vunpack.c.l.b16 %v1164
  %v1294 = vunpack.c.l.b16 %v1165
  %v1295 = vpack.c.b16 %v1292, %v1291
  %v1296 = vpack.c.b16 %v1294, %v1293
  %v1300 = vsel %vm73, %v1286, 0
  %1302 = vmatprep.subr.bf16.mxu0 0
  %1303 = vmatpush1.bf16.msra.mxu0 %v1295
  %1304 = vmatprep.subr.bf16.mxu0 0
  %1305 = vmatpush1.bf16.msra.mxu0 %v1296
  %1306 = vmatprep.subr.bf16.mxu0 0
  %1307 = vmatpush1.bf16.msra.mxu0 0
  %1308 = vmatprep.subr.bf16.mxu0 0
  %1309 = vmatpush1.bf16.msra.mxu0 0
  %1310 = vmatprep.subr.bf16.mxu0 0
  %1311 = vmatpush1.bf16.msra.mxu0 0
  %1312 = vmatprep.subr.bf16.mxu0 0
  %1313 = vmatpush1.bf16.msra.mxu0 0
  %1314 = vmatprep.subr.bf16.mxu0 0
  %1315 = vmatpush1.bf16.msra.mxu0 0
  %1316 = vmatprep.subr.bf16.mxu0 0
  %1317 = vmatpush1.bf16.msra.mxu0 0
  %1318 = vmatprep.subr.bf16.mxu0 0
  %1319 = vmatpush1.bf16.msra.mxu0 0
  %1320 = vmatprep.subr.bf16.mxu0 0
  %1321 = vmatpush1.bf16.msra.mxu0 0
  %1322 = vmatprep.subr.bf16.mxu0 0
  %1323 = vmatpush1.bf16.msra.mxu0 0
  %1324 = vmatprep.subr.bf16.mxu0 0
  %1325 = vmatpush1.bf16.msra.mxu0 0
  %1326 = vmatprep.subr.bf16.mxu0 0
  %1327 = vmatpush1.bf16.msra.mxu0 0
  %1328 = vmatprep.subr.bf16.mxu0 0
  %1329 = vmatpush1.bf16.msra.mxu0 0
  %1330 = vmatprep.subr.bf16.mxu0 0
  %1331 = vmatpush1.bf16.msra.mxu0 0
  %1332 = vmatprep.subr.bf16.mxu0 0
  %1333 = vmatpush1.bf16.msra.mxu0 0
  %1334 = vmatprep.mubr.bf16.mxu0 0
  %1335 = vmatmul.mubr.bf16.gmra.mrb[0].mxu0 %v1300
  %v1336 = vpop.f32.mrb[0].mxu0
  %v1337 = vadd.f32 %v1258, %v1336
  %v1338 = vpop.f32.mrb[0].mxu0
  %v1339 = vpop.f32.mrb[0].mxu0
  %v1340 = vpop.f32.mrb[0].mxu0
  %1341 = vdwg.mxu0
  %v1342 = vld [vmem:[%s10] sm:$0x1]
  %v1344 = vlaneseq
  %v1345 = vshrl.u32 %v1344, 7
  %v1346 = vsub.s32 0, %v1345
  %v1347 = vrot.slane %v1342, %v1346
  %v1349 = vadd.f32 %v1337, %v1347
  %1350 = vst [vmem:[%s11] sm:$0xff] %v1349
  // Predicated region
  $region46: #{coattention_forward.1} parent=0 // pred_check
    _
  $region47: #{coattention_forward.1} parent=0 // pred_check_branch
    %1352 = sbr.rel (0) target = $region49
  $region48: #{coattention_forward.1} parent=0 // pred_region
    _
  $region49: #{coattention_forward.1} parent=0 // pred_fallthru
    _
  // Predicated region
  $region50: #{coattention_forward.1} parent=0 // pred_check
    _
  $region51: #{coattention_forward.1} parent=0 // pred_check_branch
    %1354 = sbr.rel (0) target = $region53
  $region52: #{coattention_forward.1} parent=0 // pred_region
    _
  $region53: #{coattention_forward.1} parent=0 // pred_fallthru
    _

</llo_original>
